<compile_context>
chip_gen: v6e
topology: v6e:2x2x1
jax: 0.10.0
libtpu: 0.0.40
codegen_flags: <defaults>
</compile_context>

<pallas_src>
import numpy as np
import jax
import jax.numpy as jnp
from jax import lax
from jax.experimental import pallas as pl
from jax.experimental.pallas import tpu as pltpu


def _npairs_lse_kernel(alpha_ref, q_ref, k_ref, pmean_ref, hpos_ref,
                       loss_ref, q_sc, m_sc, d_sc):
    i = pl.program_id(0)          # row tile  (parallel)
    j = pl.program_id(1)          # col tile  (reduction axis, last)
    tm = q_ref.shape[0]
    tk = k_ref.shape[0]

    @pl.when(j == 0)
    def _init():
        # Fold alpha into the query tile once per row tile (f32 scale -> bf16 MXU feed).
        q_sc[...] = (q_ref[...] * alpha_ref[0]).astype(jnp.bfloat16)
        m_sc[...] = jnp.full_like(m_sc, -jnp.inf)
        d_sc[...] = jnp.zeros_like(d_sc)

    # (tm, tk) scaled similarity tile on the MXU: bf16 x bf16 -> f32 accumulate.
    s = lax.dot_general(q_sc[...], k_ref[...],
                        dimension_numbers=(((1,), (1,)), ((), ())),
                        preferred_element_type=jnp.float32)

    # Streaming (flash-style) log-sum-exp over the off-diagonal columns.
    def _online_update(s_m):
        tile_max = jnp.max(s_m, axis=1, keepdims=True)                # (tm, 1)
        m_prev = m_sc[...]
        m_new = jnp.maximum(m_prev, tile_max)
        d_sc[...] = (d_sc[...] * jnp.exp(m_prev - m_new)
                     + jnp.sum(jnp.exp(s_m - m_new), axis=1, keepdims=True))
        m_sc[...] = m_new

    # Only tiles that intersect the diagonal pay for the iota/compare/where mask.
    row0 = i * tm
    col0 = j * tk
    on_diag = jnp.logical_and(col0 < row0 + tm, row0 < col0 + tk)

    @pl.when(on_diag)
    def _diag_tile():
        rg = lax.broadcasted_iota(jnp.int32, (tm, tk), 0) + (row0 - col0)
        cg = lax.broadcasted_iota(jnp.int32, (tm, tk), 1)
        # mask BEFORE exp: exp(-inf) = 0
        _online_update(jnp.where(rg != cg, s, -jnp.inf))

    @pl.when(jnp.logical_not(on_diag))
    def _off_diag_tile():
        _online_update(s)

    @pl.when(j == pl.num_programs(1) - 1)
    def _finalize():
        # Soft labels sum to 1  =>  row CE = logsumexp(off-diag scaled sims)
        #                                     - mean(scaled positive sims).
        # The positive mean (already * alpha, exact divide) is precomputed
        # outside via class centroids; rows with no positive are masked out.
        row_loss = m_sc[...] + jnp.log(d_sc[...]) - pmean_ref[...]    # (tm, 1)
        part = jnp.sum(row_loss * hpos_ref[...], axis=0, keepdims=True)  # (1, 1)
        loss_ref[0] = part * jnp.ones((8, 128), jnp.float32)  # lane-dense partial


def _pick_tile(n, cap, multiple):
    """Largest tile <= cap that is a multiple of `multiple` and divides n, else n."""
    t = min(cap, (n // multiple) * multiple)
    while t >= multiple:
        if n % t == 0:
            return t
        t -= multiple
    return n


def npairs_loss(embeddings, labels, alpha, *, block_m=None, block_k=None,
                vmem_limit_bytes=48 * 1024 * 1024):
    """embeddings: (N, D) float (l2-normalized); labels: (N,) int; alpha: scalar."""
    n, d = embeddings.shape
    if block_m is None:
        # Cap at N/2 so the parallel row axis has >= 2 tiles (v7x 2-TC sharding);
        # 16-row alignment keeps the bf16 query scratch fully sublane-packed.
        block_m = _pick_tile(n, max(16, min(512, n // 2)), 16)
    if block_k is None:
        # 256-aligned column tiles for the 256-wide v6e/v7x MXU; big tiles
        # amortize the per-step grid overhead and the (tm,1) rescale work.
        block_k = _pick_tile(n, 1024, 256)
        if block_k == n and n > 1024:
            block_k = _pick_tile(n, 1024, 128)
    assert n % block_m == 0 and n % block_k == 0
    g_rows, g_cols = n // block_m, n // block_k

    emb_f32 = embeddings.astype(jnp.float32)
    emb_k = embeddings.astype(jnp.bfloat16)    # bf16 keys: half the streamed DMA, MXU-native
    alpha_f = jnp.asarray(alpha, jnp.float32).reshape(())
    alpha_arr = alpha_f.reshape(1)
    labels = labels.astype(jnp.int32)

    # ---- O(N*D) label-side precompute (replaces all in-kernel positive logic) ----
    # sum_{j!=i, label_j==label_i} q_i.q_j  =  q_i . class_sum(label_i) - q_i.q_i
    _, inv = jnp.unique(labels, return_inverse=True, size=n)
    inv = inv.reshape(n)
    class_sum = jax.ops.segment_sum(emb_f32, inv, num_segments=n)              # (<=n, d)
    class_cnt = jax.ops.segment_sum(jnp.ones((n,), jnp.float32), inv, num_segments=n)
    pos_cnt = class_cnt[inv] - 1.0                                             # (n,)
    has_pos = (pos_cnt > 0.5).astype(jnp.float32)                              # (n,)
    pos_sum = (jnp.sum(emb_f32 * class_sum[inv], axis=1)
               - jnp.sum(emb_f32 * emb_f32, axis=1))                           # (n,)
    pos_mean = alpha_f * pos_sum / jnp.maximum(pos_cnt, 1.0)                   # exact divide
    pmean = pos_mean.reshape(n, 1)
    hpos = has_pos.reshape(n, 1)

    cost = pl.CostEstimate(
        flops=int(2 * n * n * d + 8 * n * n),
        transcendentals=int(n * n),
        bytes_accessed=int(n * d * 4 + g_rows * n * d * 2 + 8 * n
                           + g_rows * 8 * 128 * 4),
    )

    loss_part = pl.pallas_call(
        _npairs_lse_kernel,
        out_shape=jax.ShapeDtypeStruct((g_rows, 8, 128), jnp.float32),
        grid_spec=pltpu.PrefetchScalarGridSpec(
            num_scalar_prefetch=0,
            grid=(g_rows, g_cols),
            in_specs=[
                pl.BlockSpec(memory_space=pltpu.MemorySpace.SMEM),   # alpha scalar
                pl.BlockSpec((block_m, d), lambda i, j: (i, 0)),     # query tile (f32)
                pl.BlockSpec((block_k, d), lambda i, j: (j, 0)),     # key tile (bf16, streamed)
                pl.BlockSpec((block_m, 1), lambda i, j: (i, 0)),     # per-row positive mean
                pl.BlockSpec((block_m, 1), lambda i, j: (i, 0)),     # per-row has-positive flag
            ],
            out_specs=pl.BlockSpec((1, 8, 128), lambda i, j: (i, 0, 0)),  # partial loss sum
            scratch_shapes=[
                pltpu.VMEM((block_m, d), jnp.bfloat16),   # alpha-scaled query tile
                pltpu.VMEM((block_m, 1), jnp.float32),    # running max
                pltpu.VMEM((block_m, 1), jnp.float32),    # running denom
            ],
        ),
        compiler_params=pltpu.CompilerParams(
            dimension_semantics=("parallel", "arbitrary"),
            vmem_limit_bytes=int(vmem_limit_bytes),
        ),
        cost_estimate=cost,
    )(alpha_arr, emb_f32, emb_k, pmean, hpos)

    loss_sum = jnp.sum(loss_part[:, 0, 0])
    den = jnp.sum(has_pos)
    # Guard: batch with no positive pair anywhere -> 0 instead of NaN.
    return loss_sum / jnp.maximum(den, 1.0)


def numpy_reference(emb, labels, alpha):
    emb = np.asarray(emb, np.float32)
    labels = np.asarray(labels)
    sims = emb @ emb.T
    n = sims.shape[0]
    pos = (labels[None, :] == labels[:, None]).astype(np.float32)
    mask = ~np.eye(n, dtype=bool)
    pos = pos[mask].reshape(n, n - 1)
    sims = sims[mask].reshape(n, n - 1)
    rows = pos.sum(axis=1) > 0
    pos = pos[rows]
    sims = sims[rows] * alpha
    soft = pos / pos.sum(axis=1, keepdims=True)
    z = sims - sims.max(axis=1, keepdims=True)
    logits = z - np.log(np.exp(z).sum(axis=1, keepdims=True))
    return float(np.mean(np.sum(-logits * soft, axis=1)))


if __name__ == "__main__":
    key = jax.random.PRNGKey(0)
    n, d = 256, 128
    alpha = 1.0   # module __init__ default: learnable scalar initialized to 1.0

    emb = jax.random.normal(key, (n, d), dtype=jnp.float32)
    emb = emb / jnp.linalg.norm(emb, axis=1, keepdims=True)

    # 125 classes appearing twice + 6 singleton classes (rows with no positive
    # pair, dropped by the loss exactly like torch's nonzero() row selection).
    labels = jnp.concatenate([
        jnp.repeat(jnp.arange(125, dtype=jnp.int32), 2),
        jnp.arange(1000, 1006, dtype=jnp.int32),
    ])

    # block_m/block_k chosen so the demo exercises a real 2x2 grid: parallel
    # row tiles, online column reduction, and BOTH the on-diagonal (masked)
    # and off-diagonal (unmasked, cheap) tile paths.
    loss = npairs_loss(emb, labels, alpha, block_m=128, block_k=128)
    loss = jax.block_until_ready(loss)

    ref = numpy_reference(np.asarray(emb), np.asarray(labels), alpha)
    assert np.allclose(float(loss), ref, rtol=1e-2, atol=1e-2), (float(loss), ref)

    print("KERNEL_OK")
</pallas_src>

<mosaic_0001>
module attributes {stable_mosaic.version = 11 : i64} {
  func.func @_npairs_lse_kernel(%arg0: i32, %arg1: i32, %arg2: memref<1xf32, #tpu.memory_space<smem>>, %arg3: memref<128x128xf32, #tpu.memory_space<vmem>>, %arg4: memref<128x128xbf16, #tpu.memory_space<vmem>>, %arg5: memref<128x1xf32, #tpu.memory_space<vmem>>, %arg6: memref<128x1xf32, #tpu.memory_space<vmem>>, %arg7: memref<1x8x128xf32, #tpu.memory_space<vmem>>, %arg8: memref<128x128xbf16, #tpu.memory_space<vmem>>, %arg9: memref<128x1xf32, #tpu.memory_space<vmem>>, %arg10: memref<128x1xf32, #tpu.memory_space<vmem>>) attributes {dimension_semantics = [#tpu.dimension_semantics<parallel>, #tpu.dimension_semantics<arbitrary>], iteration_bounds = array<i64: 2, 2>, scalar_prefetch = 0 : i64, scratch_operands = 3 : i64, tpu.core_type = #tpu.core_type<tc>, window_params = [{transform_indices = @transform_0, window_bounds = array<i64: 1>}, {transform_indices = @transform_1, window_bounds = array<i64: 128, 128>}, {transform_indices = @transform_2, window_bounds = array<i64: 128, 128>}, {transform_indices = @transform_3, window_bounds = array<i64: 128, 1>}, {transform_indices = @transform_4, window_bounds = array<i64: 128, 1>}, {transform_indices = @transform_5, window_bounds = array<i64: 1, 8, 128>}]} {
    %c0_i32 = arith.constant 0 : i32
    %0 = arith.cmpi eq, %arg1, %c0_i32 : i32
    %1 = arith.extui %0 : i1 to i32
    %c0_i32_0 = arith.constant 0 : i32
    %2 = arith.cmpi ne, %1, %c0_i32_0 : i32
    scf.if %2 {
      %c0_10 = arith.constant 0 : index
      %c0_11 = arith.constant 0 : index
      %21 = vector.load %arg3[%c0_10, %c0_11] : memref<128x128xf32, #tpu.memory_space<vmem>>, vector<128x128xf32>
      %c0_12 = arith.constant 0 : index
      %22 = memref.load %arg2[%c0_12] : memref<1xf32, #tpu.memory_space<smem>>
      %23 = vector.broadcast %22 : f32 to vector<128x128xf32>
      %24 = arith.mulf %21, %23 : vector<128x128xf32>
      %25 = arith.truncf %24 : vector<128x128xf32> to vector<128x128xbf16>
      %c0_13 = arith.constant 0 : index
      %c0_14 = arith.constant 0 : index
      %26 = vector.load %arg8[%c0_13, %c0_14] : memref<128x128xbf16, #tpu.memory_space<vmem>>, vector<128x128xbf16>
      tpu.vector_store %arg8[%c0_13, %c0_14], %25 {strides = array<i32>} : memref<128x128xbf16, #tpu.memory_space<vmem>>, vector<128x128xbf16>,
      %cst_15 = arith.constant 0xFF800000 : f32
      %27 = vector.broadcast %cst_15 : f32 to vector<128x1xf32>
      %c0_16 = arith.constant 0 : index
      %c0_17 = arith.constant 0 : index
      %28 = vector.load %arg9[%c0_16, %c0_17] : memref<128x1xf32, #tpu.memory_space<vmem>>, vector<128x1xf32>
      tpu.vector_store %arg9[%c0_16, %c0_17], %27 {strides = array<i32>} : memref<128x1xf32, #tpu.memory_space<vmem>>, vector<128x1xf32>,
      %cst_18 = arith.constant 0.000000e+00 : f32
      %29 = vector.broadcast %cst_18 : f32 to vector<128x1xf32>
      %c0_19 = arith.constant 0 : index
      %c0_20 = arith.constant 0 : index
      %30 = vector.load %arg10[%c0_19, %c0_20] : memref<128x1xf32, #tpu.memory_space<vmem>>, vector<128x1xf32>
      tpu.vector_store %arg10[%c0_19, %c0_20], %29 {strides = array<i32>} : memref<128x1xf32, #tpu.memory_space<vmem>>, vector<128x1xf32>,
    } else {
    }
    %c0 = arith.constant 0 : index
    %c0_1 = arith.constant 0 : index
    %3 = vector.load %arg8[%c0, %c0_1] : memref<128x128xbf16, #tpu.memory_space<vmem>>, vector<128x128xbf16>
    %c0_2 = arith.constant 0 : index
    %c0_3 = arith.constant 0 : index
    %4 = vector.load %arg4[%c0_2, %c0_3] : memref<128x128xbf16, #tpu.memory_space<vmem>>, vector<128x128xbf16>
    %cst = arith.constant dense<0.000000e+00> : vector<128x128xf32>
    %5 = tpu.matmul %3, %4, %cst {dimension_numbers = #tpu.dot_dimension_numbers<[1], [1], [0], [0], [0, 0, 1, 0], [], []>} : vector<128x128xbf16>, vector<128x128xbf16>, vector<128x128xf32> -> vector<128x128xf32>
    %c128_i32 = arith.constant 128 : i32
    %6 = arith.muli %arg0, %c128_i32 : i32
    %c128_i32_4 = arith.constant 128 : i32
    %7 = arith.muli %arg1, %c128_i32_4 : i32
    %c128_i32_5 = arith.constant 128 : i32
    %8 = arith.addi %6, %c128_i32_5 : i32
    %9 = arith.cmpi slt, %7, %8 : i32
    %c128_i32_6 = arith.constant 128 : i32
    %10 = arith.addi %7, %c128_i32_6 : i32
    %11 = arith.cmpi slt, %6, %10 : i32
    %12 = arith.andi %9, %11 : i1
    %13 = arith.extui %12 : i1 to i32
    %c0_i32_7 = arith.constant 0 : i32
    %14 = arith.cmpi ne, %13, %c0_i32_7 : i32
    scf.if %14 {
      %21 = tpu.iota {dimensions = array<i32: 0>} : vector<128x128xi32>
      %22 = arith.subi %6, %7 : i32
      %23 = vector.broadcast %22 : i32 to vector<128x128xi32>
      %24 = arith.addi %21, %23 : vector<128x128xi32>
      %25 = tpu.iota {dimensions = array<i32: 1>} : vector<128x128xi32>
      %26 = arith.cmpi ne, %24, %25 : vector<128x128xi32>
      %cst_10 = arith.constant 0xFF800000 : f32
      %27 = vector.broadcast %cst_10 : f32 to vector<128x128xf32>
      %28 = arith.select %26, %5, %27 : vector<128x128xi1>, vector<128x128xf32>
      %cst_11 = arith.constant dense<0xFF800000> : vector<128xf32>
      %29 = vector.multi_reduction <maximumf>, %28, %cst_11 [1] : vector<128x128xf32> to vector<128xf32>
      %30 = vector.shape_cast %29 : vector<128xf32> to vector<128x1xf32>
      %c0_12 = arith.constant 0 : index
      %c0_13 = arith.constant 0 : index
      %31 = vector.load %arg9[%c0_12, %c0_13] : memref<128x1xf32, #tpu.memory_space<vmem>>, vector<128x1xf32>
      %32 = arith.maximumf %31, %30 : vector<128x1xf32>
      %c0_14 = arith.constant 0 : index
      %c0_15 = arith.constant 0 : index
      %33 = vector.load %arg10[%c0_14, %c0_15] : memref<128x1xf32, #tpu.memory_space<vmem>>, vector<128x1xf32>
      %34 = arith.subf %31, %32 : vector<128x1xf32>
      %35 = math.exp %34 : vector<128x1xf32>
      %36 = arith.mulf %33, %35 : vector<128x1xf32>
      %37 = vector.broadcast %32 : vector<128x1xf32> to vector<128x128xf32>
      %38 = arith.subf %28, %37 : vector<128x128xf32>
      %39 = math.exp %38 : vector<128x128xf32>
      %cst_16 = arith.constant dense<0.000000e+00> : vector<128xf32>
      %40 = vector.multi_reduction <add>, %39, %cst_16 [1] : vector<128x128xf32> to vector<128xf32>
      %41 = vector.shape_cast %40 : vector<128xf32> to vector<128x1xf32>
      %42 = arith.addf %36, %41 : vector<128x1xf32>
      %c0_17 = arith.constant 0 : index
      %c0_18 = arith.constant 0 : index
      %43 = vector.load %arg10[%c0_17, %c0_18] : memref<128x1xf32, #tpu.memory_space<vmem>>, vector<128x1xf32>
      tpu.vector_store %arg10[%c0_17, %c0_18], %42 {strides = array<i32>} : memref<128x1xf32, #tpu.memory_space<vmem>>, vector<128x1xf32>,
      %c0_19 = arith.constant 0 : index
      %c0_20 = arith.constant 0 : index
      %44 = vector.load %arg9[%c0_19, %c0_20] : memref<128x1xf32, #tpu.memory_space<vmem>>, vector<128x1xf32>
      tpu.vector_store %arg9[%c0_19, %c0_20], %32 {strides = array<i32>} : memref<128x1xf32, #tpu.memory_space<vmem>>, vector<128x1xf32>,
    } else {
    }
    %true = arith.constant true
    %15 = arith.xori %12, %true : i1
    %16 = arith.extui %15 : i1 to i32
    %c0_i32_8 = arith.constant 0 : i32
    %17 = arith.cmpi ne, %16, %c0_i32_8 : i32
    scf.if %17 {
      %cst_10 = arith.constant dense<0xFF800000> : vector<128xf32>
      %21 = vector.multi_reduction <maximumf>, %5, %cst_10 [1] : vector<128x128xf32> to vector<128xf32>
      %22 = vector.shape_cast %21 : vector<128xf32> to vector<128x1xf32>
      %c0_11 = arith.constant 0 : index
      %c0_12 = arith.constant 0 : index
      %23 = vector.load %arg9[%c0_11, %c0_12] : memref<128x1xf32, #tpu.memory_space<vmem>>, vector<128x1xf32>
      %24 = arith.maximumf %23, %22 : vector<128x1xf32>
      %c0_13 = arith.constant 0 : index
      %c0_14 = arith.constant 0 : index
      %25 = vector.load %arg10[%c0_13, %c0_14] : memref<128x1xf32, #tpu.memory_space<vmem>>, vector<128x1xf32>
      %26 = arith.subf %23, %24 : vector<128x1xf32>
      %27 = math.exp %26 : vector<128x1xf32>
      %28 = arith.mulf %25, %27 : vector<128x1xf32>
      %29 = vector.broadcast %24 : vector<128x1xf32> to vector<128x128xf32>
      %30 = arith.subf %5, %29 : vector<128x128xf32>
      %31 = math.exp %30 : vector<128x128xf32>
      %cst_15 = arith.constant dense<0.000000e+00> : vector<128xf32>
      %32 = vector.multi_reduction <add>, %31, %cst_15 [1] : vector<128x128xf32> to vector<128xf32>
      %33 = vector.shape_cast %32 : vector<128xf32> to vector<128x1xf32>
      %34 = arith.addf %28, %33 : vector<128x1xf32>
      %c0_16 = arith.constant 0 : index
      %c0_17 = arith.constant 0 : index
      %35 = vector.load %arg10[%c0_16, %c0_17] : memref<128x1xf32, #tpu.memory_space<vmem>>, vector<128x1xf32>
      tpu.vector_store %arg10[%c0_16, %c0_17], %34 {strides = array<i32>} : memref<128x1xf32, #tpu.memory_space<vmem>>, vector<128x1xf32>,
      %c0_18 = arith.constant 0 : index
      %c0_19 = arith.constant 0 : index
      %36 = vector.load %arg9[%c0_18, %c0_19] : memref<128x1xf32, #tpu.memory_space<vmem>>, vector<128x1xf32>
      tpu.vector_store %arg9[%c0_18, %c0_19], %24 {strides = array<i32>} : memref<128x1xf32, #tpu.memory_space<vmem>>, vector<128x1xf32>,
    } else {
    }
    %c1_i32 = arith.constant 1 : i32
    %18 = arith.cmpi eq, %arg1, %c1_i32 : i32
    %19 = arith.extui %18 : i1 to i32
    %c0_i32_9 = arith.constant 0 : i32
    %20 = arith.cmpi ne, %19, %c0_i32_9 : i32
    scf.if %20 {
      %c0_10 = arith.constant 0 : index
      %c0_11 = arith.constant 0 : index
      %21 = vector.load %arg9[%c0_10, %c0_11] : memref<128x1xf32, #tpu.memory_space<vmem>>, vector<128x1xf32>
      %c0_12 = arith.constant 0 : index
      %c0_13 = arith.constant 0 : index
      %22 = vector.load %arg10[%c0_12, %c0_13] : memref<128x1xf32, #tpu.memory_space<vmem>>, vector<128x1xf32>
      %23 = math.log %22 : vector<128x1xf32>
      %24 = arith.addf %21, %23 : vector<128x1xf32>
      %c0_14 = arith.constant 0 : index
      %c0_15 = arith.constant 0 : index
      %25 = vector.load %arg5[%c0_14, %c0_15] : memref<128x1xf32, #tpu.memory_space<vmem>>, vector<128x1xf32>
      %26 = arith.subf %24, %25 : vector<128x1xf32>
      %c0_16 = arith.constant 0 : index
      %c0_17 = arith.constant 0 : index
      %27 = vector.load %arg6[%c0_16, %c0_17] : memref<128x1xf32, #tpu.memory_space<vmem>>, vector<128x1xf32>
      %28 = arith.mulf %26, %27 : vector<128x1xf32>
      %cst_18 = arith.constant dense<0.000000e+00> : vector<1xf32>
      %29 = vector.multi_reduction <add>, %28, %cst_18 [0] : vector<128x1xf32> to vector<1xf32>
      %30 = vector.shape_cast %29 : vector<1xf32> to vector<1x1xf32>
      %cst_19 = arith.constant 1.000000e+00 : f32
      %31 = vector.broadcast %cst_19 : f32 to vector<8x128xf32>
      %32 = vector.broadcast %30 : vector<1x1xf32> to vector<8x128xf32>
      %33 = arith.mulf %32, %31 : vector<8x128xf32>
      %c0_20 = arith.constant 0 : index
      %c0_21 = arith.constant 0 : index
      %c0_22 = arith.constant 0 : index
      %34 = vector.load %arg7[%c0_20, %c0_21, %c0_22] : memref<1x8x128xf32, #tpu.memory_space<vmem>>, vector<1x8x128xf32>
      %35 = vector.shape_cast %34 : vector<1x8x128xf32> to vector<8x128xf32>
      %36 = vector.shape_cast %33 : vector<8x128xf32> to vector<1x8x128xf32>
      tpu.vector_store %arg7[%c0_20, %c0_21, %c0_22], %36 {strides = array<i32>} : memref<1x8x128xf32, #tpu.memory_space<vmem>>, vector<1x8x128xf32>,
    } else {
    }
    return
  }
  func.func @transform_0(%arg0: i32, %arg1: i32) -> i32 {
    %c0_i32 = arith.constant 0 : i32
    %c0_i32_0 = arith.constant 0 : i32
    return %c0_i32 : i32
  }
  func.func @transform_1(%arg0: i32, %arg1: i32) -> (i32, i32) {
    %c0_i32 = arith.constant 0 : i32
    %c0_i32_0 = arith.constant 0 : i32
    return %arg0, %c0_i32 : i32, i32
  }
  func.func @transform_2(%arg0: i32, %arg1: i32) -> (i32, i32) {
    %c0_i32 = arith.constant 0 : i32
    %c0_i32_0 = arith.constant 0 : i32
    return %arg1, %c0_i32 : i32, i32
  }
  func.func @transform_3(%arg0: i32, %arg1: i32) -> (i32, i32) {
    %c0_i32 = arith.constant 0 : i32
    %c0_i32_0 = arith.constant 0 : i32
    return %arg0, %c0_i32 : i32, i32
  }
  func.func @transform_4(%arg0: i32, %arg1: i32) -> (i32, i32) {
    %c0_i32 = arith.constant 0 : i32
    %c0_i32_0 = arith.constant 0 : i32
    return %arg0, %c0_i32 : i32, i32
  }
  func.func @transform_5(%arg0: i32, %arg1: i32) -> (i32, i32, i32) {
    %c0_i32 = arith.constant 0 : i32
    %c0_i32_0 = arith.constant 0 : i32
    %c0_i32_1 = arith.constant 0 : i32
    return %arg0, %c0_i32, %c0_i32_0 : i32, i32, i32
  }
}

</mosaic_0001>

<llo_original>
// kernel: tpu_custom_call.1
$region0: #{tpu_custom_call.1}
  #allocation0 [shape = 'u32[]', space=smem, size = 0x4, offset = 0x4, fixed_abs, tag = 'smem constant byte address 0x4 - core index']
  #allocation1 [shape = 'u32[144,128]{1,0:T(1,128)}', space=vmem, size = 0x12000, scoped, tag = 'internal scratch']
  #allocation2 [shape = 'bf16[128,128]{1,0:T(8,128)(2,1)}', space=vmem, size = 0x8000, scoped, tag = 'scratch operand']
  #allocation3 [shape = 'f32[128,1]{1,0:T(8,128)}', space=vmem, size = 0x10000, scoped, tag = 'scratch operand']
  #allocation4 [shape = 'f32[128,1]{1,0:T(8,128)}', space=vmem, size = 0x10000, scoped, tag = 'scratch operand']
  #allocation5 [shape = 'f32[1]{0:T(128)S(6)}', space=smem, size = 0x200, scoped, tag = 'scoped memory for tpu_custom_call.1']
  %s0 = inlined_call_operand.<no memory space> [shape: f32[1], index: 0, kind: input, shape index: {}]
  %s1 = inlined_call_operand.vmem [shape: f32[256,128], index: 1, kind: input, shape index: {}]
  %s2 = inlined_call_operand.vmem [shape: bf16[256,128], index: 2, kind: input, shape index: {}]
  %s3 = inlined_call_operand.vmem [shape: f32[256,1], index: 3, kind: input, shape index: {}]
  %s4 = inlined_call_operand.vmem [shape: f32[256,1], index: 4, kind: input, shape index: {}]
  %s5 = inlined_call_operand.hbm [shape: f32[2,8,128], index: 5, kind: output, shape index: {}]
  %s6 = sld [smem:[#allocation0]]
  $region69: #{tpu_custom_call.1} parent=0
    _
  %s8 = ssub.s32 1, %s6
  %s9 = scalar_select 0, %s8, %s6
  %10 = sst [smem:[#allocation5]] %s0
  $region1: #{tpu_custom_call.1} parent=0
    #allocation6 [shape = 'u8[8192]{0}', space=vmem, size = 0x2000, scoped, tag = 'output window, operand 0']
    #allocation7 [shape = 's32[2]{0}', space=sflag, size = 0x8, scoped, tag = 'scoped memory for tpu_custom_call.1']
    %11 = vsyncpa [#allocation7], 0
    %s12 = scalar_lea.sflag [#allocation7], 1
    %13 = vsyncpa %s12, 0
    loop: start=0, step=1, limit=6
    $region2: #{tpu_custom_call.1} parent=1 // loop_pre_header
      _
    $region3: #{tpu_custom_call.1} parent=1 // loop_header
      %s15 = sphi 0, %s19
      %p16 = scmp.ge.s32.totalorder %s15, 6
      %s22 = sphi 0, %s34
      %s23 = sphi 0, %s30
      %s24 = sphi 0, %s22
      %s25 = sphi 0, %s23
      %s26 = sphi 0, %s24
      %s27 = sphi 0, %s25
      %s35 = sphi 0, %s35
      %s37 = sphi 0, %s35
      %s38 = sphi 0, %s37
      %s52 = sphi 0, %s38
      %s58 = sphi 0, %s60
      %s61 = sphi 0, %s58
      %s62 = sphi 0, %s61
      %s78 = sphi 0, %s62
      %s84 = sphi 0, %s86
      %s87 = sphi 0, %s84
      %s88 = sphi 0, %s87
      %s104 = sphi 0, %s88
      %s110 = sphi 0, %s112
      %s113 = sphi 0, %s110
      %s114 = sphi 0, %s113
      %s130 = sphi 0, %s114
      %s136 = sphi 0, %s138
      %s139 = sphi 0, %s136
      %s140 = sphi 0, %s139
      %s156 = sphi 0, %s140
      %s162 = sphi 0, %s164
      %s165 = sphi 0, %s162
      %s166 = sphi 0, %s165
      %s182 = sphi 0, %s166
    $region4: #{tpu_custom_call.1} parent=1 // loop_header_branch
      %18 = sbr.rel (%p16) target = $region8
    $region5: #{tpu_custom_call.1} parent=1 // loop_body
      %s20 = ssub.s32 %s15, 1
      %s21 = ssub.s32 %s15, 2
      %s28 = sadd.s32 1, %s23
      %p29 = scmp.ge.s32.totalorder %s28, 2
      %s30 = scalar_select %p29, 0, %s28
      %s31 = sadd.s32 1, %s22
      %s32 = scalar_select %p29, %s31, %s22
      %p33 = scmp.ge.s32.totalorder %s32, 2
      %s34 = scalar_select %p33, 0, %s32
      %s36 = sadd.s32 %s35, 1
      %p39 = scmp.eq.s32.totalorder %s15, 3
      %p40 = scmp.ne.s32.totalorder %s35, %s37
      %p41 = scmp.eq.s32.totalorder %s15, 0
      %p42 = por %p40, %p41
      %p43 = scmp.ne.s32.totalorder %s35, %s37
      %p44 = scmp.eq.s32.totalorder %s20, 3
      %p45 = por %p43, %p44
      %p46 = scmp.ne.s32.totalorder %s37, %s38
      %p47 = scmp.eq.s32.totalorder %s20, 0
      %p48 = por %p46, %p47
      %p49 = scmp.ne.s32.totalorder %s37, %s38
      %p50 = scmp.eq.s32.totalorder %s21, 3
      %p51 = por %p49, %p50
      %p53 = scmp.ne.s32.totalorder %s38, %s52
      %p54 = scmp.eq.s32.totalorder %s21, 0
      %p55 = por %p53, %p54
      %s56 = ssub.s32 %s22, %s34
      %p57 = scmp.eq.s32.totalorder %s56, 0
      %s59 = sadd.s32 %s58, 1
      %s60 = scalar_select %p57, %s58, %s59
      %p63 = pneg %p57
      %p64 = scmp.eq.s32.totalorder %s15, 3
      %p65 = por %p63, %p64
      %p66 = scmp.ne.s32.totalorder %s58, %s61
      %p67 = scmp.eq.s32.totalorder %s15, 0
      %p68 = por %p66, %p67
      %p69 = scmp.ne.s32.totalorder %s58, %s61
      %p70 = scmp.eq.s32.totalorder %s20, 3
      %p71 = por %p69, %p70
      %p72 = scmp.ne.s32.totalorder %s61, %s62
      %p73 = scmp.eq.s32.totalorder %s20, 0
      %p74 = por %p72, %p73
      %p75 = scmp.ne.s32.totalorder %s61, %s62
      %p76 = scmp.eq.s32.totalorder %s21, 3
      %p77 = por %p75, %p76
      %p79 = scmp.ne.s32.totalorder %s62, %s78
      %p80 = scmp.eq.s32.totalorder %s21, 0
      %p81 = por %p79, %p80
      %s82 = ssub.s32 %s23, %s30
      %p83 = scmp.eq.s32.totalorder %s82, 0
      %s85 = sadd.s32 %s84, 1
      %s86 = scalar_select %p83, %s84, %s85
      %p89 = pneg %p83
      %p90 = scmp.eq.s32.totalorder %s15, 3
      %p91 = por %p89, %p90
      %p92 = scmp.ne.s32.totalorder %s84, %s87
      %p93 = scmp.eq.s32.totalorder %s15, 0
      %p94 = por %p92, %p93
      %p95 = scmp.ne.s32.totalorder %s84, %s87
      %p96 = scmp.eq.s32.totalorder %s20, 3
      %p97 = por %p95, %p96
      %p98 = scmp.ne.s32.totalorder %s87, %s88
      %p99 = scmp.eq.s32.totalorder %s20, 0
      %p100 = por %p98, %p99
      %p101 = scmp.ne.s32.totalorder %s87, %s88
      %p102 = scmp.eq.s32.totalorder %s21, 3
      %p103 = por %p101, %p102
      %p105 = scmp.ne.s32.totalorder %s88, %s104
      %p106 = scmp.eq.s32.totalorder %s21, 0
      %p107 = por %p105, %p106
      %s108 = ssub.s32 %s22, %s34
      %p109 = scmp.eq.s32.totalorder %s108, 0
      %s111 = sadd.s32 %s110, 1
      %s112 = scalar_select %p109, %s110, %s111
      %p115 = pneg %p109
      %p116 = scmp.eq.s32.totalorder %s15, 3
      %p117 = por %p115, %p116
      %p118 = scmp.ne.s32.totalorder %s110, %s113
      %p119 = scmp.eq.s32.totalorder %s15, 0
      %p120 = por %p118, %p119
      %p121 = scmp.ne.s32.totalorder %s110, %s113
      %p122 = scmp.eq.s32.totalorder %s20, 3
      %p123 = por %p121, %p122
      %p124 = scmp.ne.s32.totalorder %s113, %s114
      %p125 = scmp.eq.s32.totalorder %s20, 0
      %p126 = por %p124, %p125
      %p127 = scmp.ne.s32.totalorder %s113, %s114
      %p128 = scmp.eq.s32.totalorder %s21, 3
      %p129 = por %p127, %p128
      %p131 = scmp.ne.s32.totalorder %s114, %s130
      %p132 = scmp.eq.s32.totalorder %s21, 0
      %p133 = por %p131, %p132
      %s134 = ssub.s32 %s22, %s34
      %p135 = scmp.eq.s32.totalorder %s134, 0
      %s137 = sadd.s32 %s136, 1
      %s138 = scalar_select %p135, %s136, %s137
      %p141 = pneg %p135
      %p142 = scmp.eq.s32.totalorder %s15, 3
      %p143 = por %p141, %p142
      %p144 = scmp.ne.s32.totalorder %s136, %s139
      %p145 = scmp.eq.s32.totalorder %s15, 0
      %p146 = por %p144, %p145
      %p147 = scmp.ne.s32.totalorder %s136, %s139
      %p148 = scmp.eq.s32.totalorder %s20, 3
      %p149 = por %p147, %p148
      %p150 = scmp.ne.s32.totalorder %s139, %s140
      %p151 = scmp.eq.s32.totalorder %s20, 0
      %p152 = por %p150, %p151
      %p153 = scmp.ne.s32.totalorder %s139, %s140
      %p154 = scmp.eq.s32.totalorder %s21, 3
      %p155 = por %p153, %p154
      %p157 = scmp.ne.s32.totalorder %s140, %s156
      %p158 = scmp.eq.s32.totalorder %s21, 0
      %p159 = por %p157, %p158
      %s160 = ssub.s32 %s22, %s34
      %p161 = scmp.eq.s32.totalorder %s160, 0
      %s163 = sadd.s32 %s162, 1
      %s164 = scalar_select %p161, %s162, %s163
      %p167 = pneg %p161
      %p168 = scmp.eq.s32.totalorder %s15, 3
      %p169 = por %p167, %p168
      %p170 = scmp.ne.s32.totalorder %s162, %s165
      %p171 = scmp.eq.s32.totalorder %s15, 0
      %p172 = por %p170, %p171
      %p173 = scmp.ne.s32.totalorder %s162, %s165
      %p174 = scmp.eq.s32.totalorder %s20, 3
      %p175 = por %p173, %p174
      %p176 = scmp.ne.s32.totalorder %s165, %s166
      %p177 = scmp.eq.s32.totalorder %s20, 0
      %p178 = por %p176, %p177
      %p179 = scmp.ne.s32.totalorder %s165, %s166
      %p180 = scmp.eq.s32.totalorder %s21, 3
      %p181 = por %p179, %p180
      %p183 = scmp.ne.s32.totalorder %s166, %s182
      %p184 = scmp.eq.s32.totalorder %s21, 0
      %p185 = por %p183, %p184
      %p186 = scmp.le.s32.totalorder 1, %s15
      %p187 = scmp.lt.s32.totalorder %s15, 5
      %p188 = pnand %p186, %p187
      %p189 = pneg %p188
      // Predicated region
      $region9: #{tpu_custom_call.1} parent=5 // pred_check
        _
      $region10: #{tpu_custom_call.1} parent=5 // pred_check_branch
        %191 = sbr.rel (%p188) target = $region12
      $region11: #{tpu_custom_call.1} parent=5 // pred_region
        %s192 = ssub.s32 %s15, 1
        // Predicated region
        $region13: #{tpu_custom_call.1} parent=11 // pred_check
          %p193 = pneg %p48
        $region14: #{tpu_custom_call.1} parent=11 // pred_check_branch
          %195 = sbr.rel (%p193) target = $region16
        $region15: #{tpu_custom_call.1} parent=11 // pred_region
          _
        $region16: #{tpu_custom_call.1} parent=11 // pred_fallthru
          _
      $region12: #{tpu_custom_call.1} parent=5 // pred_fallthru
        _
      %p196 = scmp.lt.s32.totalorder %s15, 4
      // Predicated region
      $region17: #{tpu_custom_call.1} parent=5 // pred_check
        %p197 = pneg %p196
      $region18: #{tpu_custom_call.1} parent=5 // pred_check_branch
        %199 = sbr.rel (%p197) target = $region20
      $region19: #{tpu_custom_call.1} parent=5 // pred_region
        // Predicated region
        $region21: #{tpu_custom_call.1} parent=19 // pred_check
          %p200 = pneg %p68
        $region22: #{tpu_custom_call.1} parent=19 // pred_check_branch
          %202 = sbr.rel (%p200) target = $region24
        $region23: #{tpu_custom_call.1} parent=19 // pred_region
          %s203 = smul.u32 16, %s22
          %p204 = scmp.lt.s32.totalorder %s203, 31
          %s205 = scalar_select %p204, %s203, 31
          %s206 = smul.addr %s205, 8
          %s207 = scalar_lea.vmem %s1, %s206
          %s208 = smul.u32 16, %s22
        $region24: #{tpu_custom_call.1} parent=19 // pred_fallthru
          _
        // Predicated region
        $region25: #{tpu_custom_call.1} parent=19 // pred_check
          %p209 = pneg %p94
        $region26: #{tpu_custom_call.1} parent=19 // pred_check_branch
          %211 = sbr.rel (%p209) target = $region28
        $region27: #{tpu_custom_call.1} parent=19 // pred_region
          %s212 = smul.u32 16, %s23
          %p213 = scmp.lt.s32.totalorder %s212, 31
          %s214 = scalar_select %p213, %s212, 31
          %s215 = smul.addr %s214, 4
          %s216 = scalar_lea.vmem %s2, %s215
          %s217 = smul.u32 16, %s23
        $region28: #{tpu_custom_call.1} parent=19 // pred_fallthru
          _
        // Predicated region
        $region29: #{tpu_custom_call.1} parent=19 // pred_check
          %p218 = pneg %p120
        $region30: #{tpu_custom_call.1} parent=19 // pred_check_branch
          %220 = sbr.rel (%p218) target = $region32
        $region31: #{tpu_custom_call.1} parent=19 // pred_region
          %s221 = smul.u32 16, %s22
          %p222 = scmp.lt.s32.totalorder %s221, 31
          %s223 = scalar_select %p222, %s221, 31
          %s224 = smul.addr %s223, 8
          %s225 = scalar_lea.vmem %s3, %s224
          %s226 = smul.u32 16, %s22
        $region32: #{tpu_custom_call.1} parent=19 // pred_fallthru
          _
        // Predicated region
        $region33: #{tpu_custom_call.1} parent=19 // pred_check
          %p227 = pneg %p146
        $region34: #{tpu_custom_call.1} parent=19 // pred_check_branch
          %229 = sbr.rel (%p227) target = $region36
        $region35: #{tpu_custom_call.1} parent=19 // pred_region
          %s230 = smul.u32 16, %s22
          %p231 = scmp.lt.s32.totalorder %s230, 31
          %s232 = scalar_select %p231, %s230, 31
          %s233 = smul.addr %s232, 8
          %s234 = scalar_lea.vmem %s4, %s233
          %s235 = smul.u32 16, %s22
        $region36: #{tpu_custom_call.1} parent=19 // pred_fallthru
          _
      $region20: #{tpu_custom_call.1} parent=5 // pred_fallthru
        _
      %p236 = scmp.le.s32.totalorder 1, %s15
      %p237 = scmp.lt.s32.totalorder %s15, 5
      %p238 = pnand %p236, %p237
      %p239 = pneg %p238
      // Predicated region
      $region37: #{tpu_custom_call.1} parent=5 // pred_check
        _
      $region38: #{tpu_custom_call.1} parent=5 // pred_check_branch
        %241 = sbr.rel (%p238) target = $region40
      $region39: #{tpu_custom_call.1} parent=5 // pred_region
        %s242 = ssub.s32 %s15, 1
        %p243 = pneg %p48
        %p244 = pneg %p45
        %s245 = smul.u32 16, %s24
        %p246 = scmp.lt.s32.totalorder %s245, 31
        %s247 = scalar_select %p246, %s245, 31
        %s248 = smul.addr %s247, 8
        %s249 = scalar_lea.vmem %s1, %s248
        %p250 = pneg %p74
        %p251 = pneg %p71
        %s252 = smul.u32 16, %s25
        %p253 = scmp.lt.s32.totalorder %s252, 31
        %s254 = scalar_select %p253, %s252, 31
        %s255 = smul.addr %s254, 4
        %s256 = scalar_lea.vmem %s2, %s255
        %p257 = pneg %p100
        %p258 = pneg %p97
        %s259 = smul.u32 16, %s24
        %p260 = scmp.lt.s32.totalorder %s259, 31
        %s261 = scalar_select %p260, %s259, 31
        %s262 = smul.addr %s261, 8
        %s263 = scalar_lea.vmem %s3, %s262
        %p264 = pneg %p126
        %p265 = pneg %p123
        %s266 = smul.u32 16, %s24
        %p267 = scmp.lt.s32.totalorder %s266, 31
        %s268 = scalar_select %p267, %s266, 31
        %s269 = smul.addr %s268, 8
        %s270 = scalar_lea.vmem %s4, %s269
        %p271 = pneg %p152
        %p272 = pneg %p149
        %p273 = pneg %p178
        %p274 = pneg %p175
        %s275 = sand.u32 %s165, 1
        %s276 = scalar_lea.sflag [#allocation7], %s275
        %s277 = sand.u32 %s165, 1
        %s278 = smul.addr %s277, 8
        %s279 = scalar_lea.vmem [#allocation6], %s278
        %s280 = smul.u32 16, %s24
        %p281 = scmp.lt.s32.totalorder %s280, 31
        %s282 = scalar_select %p281, %s280, 31
        %s283 = smul.addr %s282, 8
        %s284 = scalar_lea.vmem %s1, %s283
        %s285 = smul.u32 16, %s24
        %s286 = smul.u32 16, %s25
        %p287 = scmp.lt.s32.totalorder %s286, 31
        %s288 = scalar_select %p287, %s286, 31
        %s289 = smul.addr %s288, 4
        %s290 = scalar_lea.vmem %s2, %s289
        %s291 = smul.u32 16, %s25
        %s292 = smul.u32 16, %s24
        %p293 = scmp.lt.s32.totalorder %s292, 31
        %s294 = scalar_select %p293, %s292, 31
        %s295 = smul.addr %s294, 8
        %s296 = scalar_lea.vmem %s3, %s295
        %s297 = smul.u32 16, %s24
        %s298 = smul.u32 16, %s24
        %p299 = scmp.lt.s32.totalorder %s298, 31
        %s300 = scalar_select %p299, %s298, 31
        %s301 = smul.addr %s300, 8
        %s302 = scalar_lea.vmem %s4, %s301
        %s303 = smul.u32 16, %s24
        %p305 = scmp.eq.s32.totalorder %s25, 0
        // Predicated region
        $region41: #{tpu_custom_call.1} parent=39 // pred_check
          %p306 = pneg %p305
        $region42: #{tpu_custom_call.1} parent=39 // pred_check_branch
          %308 = sbr.rel (%p306) target = $region44
        $region43: #{tpu_custom_call.1} parent=39 // pred_region
          %v309 = vld [vmem:[%s284] sm:$0xff]
          %v310 = vld [vmem:[%s284 + $0x8] sm:$0xff]
          %v311 = vld [vmem:[%s284 + $0x10] sm:$0xff]
          %v312 = vld [vmem:[%s284 + $0x18] sm:$0xff]
          %v313 = vld [vmem:[%s284 + $0x20] sm:$0xff]
          %v314 = vld [vmem:[%s284 + $0x28] sm:$0xff]
          %v315 = vld [vmem:[%s284 + $0x30] sm:$0xff]
          %v316 = vld [vmem:[%s284 + $0x38] sm:$0xff]
          %v317 = vld [vmem:[%s284 + $0x40] sm:$0xff]
          %v318 = vld [vmem:[%s284 + $0x48] sm:$0xff]
          %v319 = vld [vmem:[%s284 + $0x50] sm:$0xff]
          %v320 = vld [vmem:[%s284 + $0x58] sm:$0xff]
          %v321 = vld [vmem:[%s284 + $0x60] sm:$0xff]
          %v322 = vld [vmem:[%s284 + $0x68] sm:$0xff]
          %v323 = vld [vmem:[%s284 + $0x70] sm:$0xff]
          %v324 = vld [vmem:[%s284 + $0x78] sm:$0xff]
          %s325 = sld [smem:[#allocation5]]
          %v326 = vstv %s325
          %v327 = vmul.f32 %v309, %v326
          %v328 = vmul.f32 %v310, %v326
          %v329 = vmul.f32 %v311, %v326
          %v330 = vmul.f32 %v312, %v326
          %v331 = vmul.f32 %v313, %v326
          %v332 = vmul.f32 %v314, %v326
          %v333 = vmul.f32 %v315, %v326
          %v334 = vmul.f32 %v316, %v326
          %v335 = vmul.f32 %v317, %v326
          %v336 = vmul.f32 %v318, %v326
          %v337 = vmul.f32 %v319, %v326
          %v338 = vmul.f32 %v320, %v326
          %v339 = vmul.f32 %v321, %v326
          %v340 = vmul.f32 %v322, %v326
          %v341 = vmul.f32 %v323, %v326
          %v342 = vmul.f32 %v324, %v326
          %v343 = vpack.c.bf16 %v328, %v327
          %v344 = vpack.c.bf16 %v330, %v329
          %v345 = vpack.c.bf16 %v332, %v331
          %v346 = vpack.c.bf16 %v334, %v333
          %v347 = vpack.c.bf16 %v336, %v335
          %v348 = vpack.c.bf16 %v338, %v337
          %v349 = vpack.c.bf16 %v340, %v339
          %v350 = vpack.c.bf16 %v342, %v341
          %v359 = vunpack.c.l.b16 %v343
          %v360 = vunpack.c.h.b16 %v343
          %v361 = vunpack.c.l.b16 %v344
          %v362 = vunpack.c.h.b16 %v344
          %v363 = vunpack.c.l.b16 %v345
          %v364 = vunpack.c.h.b16 %v345
          %v365 = vunpack.c.l.b16 %v346
          %v366 = vunpack.c.h.b16 %v346
          %v367 = vunpack.c.l.b16 %v347
          %v368 = vunpack.c.h.b16 %v347
          %v369 = vunpack.c.l.b16 %v348
          %v370 = vunpack.c.h.b16 %v348
          %v371 = vunpack.c.l.b16 %v349
          %v372 = vunpack.c.h.b16 %v349
          %v373 = vunpack.c.l.b16 %v350
          %v374 = vunpack.c.h.b16 %v350
          %v375 = vpack.c.b16 %v359, %v359
          %v376 = vpack.c.b16 %v360, %v360
          %v377 = vpack.c.b16 %v361, %v361
          %v378 = vpack.c.b16 %v362, %v362
          %v379 = vpack.c.b16 %v363, %v363
          %v380 = vpack.c.b16 %v364, %v364
          %v381 = vpack.c.b16 %v365, %v365
          %v382 = vpack.c.b16 %v366, %v366
          %v383 = vpack.c.b16 %v367, %v367
          %v384 = vpack.c.b16 %v368, %v368
          %v385 = vpack.c.b16 %v369, %v369
          %v386 = vpack.c.b16 %v370, %v370
          %v387 = vpack.c.b16 %v371, %v371
          %v388 = vpack.c.b16 %v372, %v372
          %v389 = vpack.c.b16 %v373, %v373
          %v390 = vpack.c.b16 %v374, %v374
          %407 = vst [vmem:[#allocation2] sm:$0xf] %v375
          %408 = vst [vmem:[#allocation2 + $0x4] sm:$0xf] %v376
          %409 = vst [vmem:[#allocation2 + $0x8] sm:$0xf] %v377
          %410 = vst [vmem:[#allocation2 + $0xc] sm:$0xf] %v378
          %411 = vst [vmem:[#allocation2 + $0x10] sm:$0xf] %v379
          %412 = vst [vmem:[#allocation2 + $0x14] sm:$0xf] %v380
          %413 = vst [vmem:[#allocation2 + $0x18] sm:$0xf] %v381
          %414 = vst [vmem:[#allocation2 + $0x1c] sm:$0xf] %v382
          %415 = vst [vmem:[#allocation2 + $0x20] sm:$0xf] %v383
          %416 = vst [vmem:[#allocation2 + $0x24] sm:$0xf] %v384
          %417 = vst [vmem:[#allocation2 + $0x28] sm:$0xf] %v385
          %418 = vst [vmem:[#allocation2 + $0x2c] sm:$0xf] %v386
          %419 = vst [vmem:[#allocation2 + $0x30] sm:$0xf] %v387
          %420 = vst [vmem:[#allocation2 + $0x34] sm:$0xf] %v388
          %421 = vst [vmem:[#allocation2 + $0x38] sm:$0xf] %v389
          %422 = vst [vmem:[#allocation2 + $0x3c] sm:$0xf] %v390
          %vm423 = vcmask 7168
          %424 = vst.msk [vmem:[#allocation3] sm:$0xff] %vm423, -inf
          %425 = vst.msk [vmem:[#allocation3 + $0x8] sm:$0xff] %vm423, -inf
          %426 = vst.msk [vmem:[#allocation3 + $0x10] sm:$0xff] %vm423, -inf
          %427 = vst.msk [vmem:[#allocation3 + $0x18] sm:$0xff] %vm423, -inf
          %428 = vst.msk [vmem:[#allocation3 + $0x20] sm:$0xff] %vm423, -inf
          %429 = vst.msk [vmem:[#allocation3 + $0x28] sm:$0xff] %vm423, -inf
          %430 = vst.msk [vmem:[#allocation3 + $0x30] sm:$0xff] %vm423, -inf
          %431 = vst.msk [vmem:[#allocation3 + $0x38] sm:$0xff] %vm423, -inf
          %432 = vst.msk [vmem:[#allocation3 + $0x40] sm:$0xff] %vm423, -inf
          %433 = vst.msk [vmem:[#allocation3 + $0x48] sm:$0xff] %vm423, -inf
          %434 = vst.msk [vmem:[#allocation3 + $0x50] sm:$0xff] %vm423, -inf
          %435 = vst.msk [vmem:[#allocation3 + $0x58] sm:$0xff] %vm423, -inf
          %436 = vst.msk [vmem:[#allocation3 + $0x60] sm:$0xff] %vm423, -inf
          %437 = vst.msk [vmem:[#allocation3 + $0x68] sm:$0xff] %vm423, -inf
          %438 = vst.msk [vmem:[#allocation3 + $0x70] sm:$0xff] %vm423, -inf
          %439 = vst.msk [vmem:[#allocation3 + $0x78] sm:$0xff] %vm423, -inf
          %440 = vst.msk [vmem:[#allocation4] sm:$0xff] %vm423, 0.0
          %441 = vst.msk [vmem:[#allocation4 + $0x8] sm:$0xff] %vm423, 0.0
          %442 = vst.msk [vmem:[#allocation4 + $0x10] sm:$0xff] %vm423, 0.0
          %443 = vst.msk [vmem:[#allocation4 + $0x18] sm:$0xff] %vm423, 0.0
          %444 = vst.msk [vmem:[#allocation4 + $0x20] sm:$0xff] %vm423, 0.0
          %445 = vst.msk [vmem:[#allocation4 + $0x28] sm:$0xff] %vm423, 0.0
          %446 = vst.msk [vmem:[#allocation4 + $0x30] sm:$0xff] %vm423, 0.0
          %447 = vst.msk [vmem:[#allocation4 + $0x38] sm:$0xff] %vm423, 0.0
          %448 = vst.msk [vmem:[#allocation4 + $0x40] sm:$0xff] %vm423, 0.0
          %449 = vst.msk [vmem:[#allocation4 + $0x48] sm:$0xff] %vm423, 0.0
          %450 = vst.msk [vmem:[#allocation4 + $0x50] sm:$0xff] %vm423, 0.0
          %451 = vst.msk [vmem:[#allocation4 + $0x58] sm:$0xff] %vm423, 0.0
          %452 = vst.msk [vmem:[#allocation4 + $0x60] sm:$0xff] %vm423, 0.0
          %453 = vst.msk [vmem:[#allocation4 + $0x68] sm:$0xff] %vm423, 0.0
          %454 = vst.msk [vmem:[#allocation4 + $0x70] sm:$0xff] %vm423, 0.0
          %455 = vst.msk [vmem:[#allocation4 + $0x78] sm:$0xff] %vm423, 0.0
        $region44: #{tpu_custom_call.1} parent=39 // pred_fallthru
          _
        %v456 = vld [vmem:[#allocation2] sm:$0xf]
        %v457 = vld [vmem:[#allocation2 + $0x4] sm:$0xf]
        %v458 = vld [vmem:[#allocation2 + $0x8] sm:$0xf]
        %v459 = vld [vmem:[#allocation2 + $0xc] sm:$0xf]
        %v460 = vld [vmem:[#allocation2 + $0x10] sm:$0xf]
        %v461 = vld [vmem:[#allocation2 + $0x14] sm:$0xf]
        %v462 = vld [vmem:[#allocation2 + $0x18] sm:$0xf]
        %v463 = vld [vmem:[#allocation2 + $0x1c] sm:$0xf]
        %v464 = vld [vmem:[#allocation2 + $0x20] sm:$0xf]
        %v465 = vld [vmem:[#allocation2 + $0x24] sm:$0xf]
        %v466 = vld [vmem:[#allocation2 + $0x28] sm:$0xf]
        %v467 = vld [vmem:[#allocation2 + $0x2c] sm:$0xf]
        %v468 = vld [vmem:[#allocation2 + $0x30] sm:$0xf]
        %v469 = vld [vmem:[#allocation2 + $0x34] sm:$0xf]
        %v470 = vld [vmem:[#allocation2 + $0x38] sm:$0xf]
        %v471 = vld [vmem:[#allocation2 + $0x3c] sm:$0xf]
        %v472 = vld [vmem:[%s290] sm:$0xf]
        %v473 = vld [vmem:[%s290 + $0x4] sm:$0xf]
        %v474 = vld [vmem:[%s290 + $0x8] sm:$0xf]
        %v475 = vld [vmem:[%s290 + $0xc] sm:$0xf]
        %v476 = vld [vmem:[%s290 + $0x10] sm:$0xf]
        %v477 = vld [vmem:[%s290 + $0x14] sm:$0xf]
        %v478 = vld [vmem:[%s290 + $0x18] sm:$0xf]
        %v479 = vld [vmem:[%s290 + $0x1c] sm:$0xf]
        %v480 = vld [vmem:[%s290 + $0x20] sm:$0xf]
        %v481 = vld [vmem:[%s290 + $0x24] sm:$0xf]
        %v482 = vld [vmem:[%s290 + $0x28] sm:$0xf]
        %v483 = vld [vmem:[%s290 + $0x2c] sm:$0xf]
        %v484 = vld [vmem:[%s290 + $0x30] sm:$0xf]
        %v485 = vld [vmem:[%s290 + $0x34] sm:$0xf]
        %v486 = vld [vmem:[%s290 + $0x38] sm:$0xf]
        %v487 = vld [vmem:[%s290 + $0x3c] sm:$0xf]
        %v504 = vunpack.c.l.b16 %v456
        %v505 = vunpack.c.l.b16 %v457
        %v506 = vunpack.c.l.b16 %v458
        %v507 = vunpack.c.l.b16 %v459
        %v508 = vunpack.c.l.b16 %v460
        %v509 = vunpack.c.l.b16 %v461
        %v510 = vunpack.c.l.b16 %v462
        %v511 = vunpack.c.l.b16 %v463
        %v512 = vunpack.c.l.b16 %v464
        %v513 = vunpack.c.l.b16 %v465
        %v514 = vunpack.c.l.b16 %v466
        %v515 = vunpack.c.l.b16 %v467
        %v516 = vunpack.c.l.b16 %v468
        %v517 = vunpack.c.l.b16 %v469
        %v518 = vunpack.c.l.b16 %v470
        %v519 = vunpack.c.l.b16 %v471
        %v520 = vpack.c.b16 %v505, %v504
        %v521 = vpack.c.b16 %v507, %v506
        %v522 = vpack.c.b16 %v509, %v508
        %v523 = vpack.c.b16 %v511, %v510
        %v524 = vpack.c.b16 %v513, %v512
        %v525 = vpack.c.b16 %v515, %v514
        %v526 = vpack.c.b16 %v517, %v516
        %v527 = vpack.c.b16 %v519, %v518
        %v552 = vunpack.c.l.b16 %v472
        %v553 = vunpack.c.l.b16 %v473
        %v554 = vunpack.c.l.b16 %v474
        %v555 = vunpack.c.l.b16 %v475
        %v556 = vunpack.c.l.b16 %v476
        %v557 = vunpack.c.l.b16 %v477
        %v558 = vunpack.c.l.b16 %v478
        %v559 = vunpack.c.l.b16 %v479
        %v560 = vunpack.c.l.b16 %v480
        %v561 = vunpack.c.l.b16 %v481
        %v562 = vunpack.c.l.b16 %v482
        %v563 = vunpack.c.l.b16 %v483
        %v564 = vunpack.c.l.b16 %v484
        %v565 = vunpack.c.l.b16 %v485
        %v566 = vunpack.c.l.b16 %v486
        %v567 = vunpack.c.l.b16 %v487
        %v568 = vpack.c.b16 %v553, %v552
        %v569 = vpack.c.b16 %v555, %v554
        %v570 = vpack.c.b16 %v557, %v556
        %v571 = vpack.c.b16 %v559, %v558
        %v572 = vpack.c.b16 %v561, %v560
        %v573 = vpack.c.b16 %v563, %v562
        %v574 = vpack.c.b16 %v565, %v564
        %v575 = vpack.c.b16 %v567, %v566
        %584 = vmatprep.subr.bf16.mxu0 0
        %585 = vmatpush1.bf16.xpose.msra.mxu0 %v575
        %586 = vmatprep.subr.bf16.mxu0 0
        %587 = vmatpush1.bf16.xpose.msra.mxu0 %v574
        %588 = vmatprep.subr.bf16.mxu0 0
        %589 = vmatpush1.bf16.xpose.msra.mxu0 %v573
        %590 = vmatprep.subr.bf16.mxu0 0
        %591 = vmatpush1.bf16.xpose.msra.mxu0 %v572
        %592 = vmatprep.subr.bf16.mxu0 0
        %593 = vmatpush1.bf16.xpose.msra.mxu0 %v571
        %594 = vmatprep.subr.bf16.mxu0 0
        %595 = vmatpush1.bf16.xpose.msra.mxu0 %v570
        %596 = vmatprep.subr.bf16.mxu0 0
        %597 = vmatpush1.bf16.xpose.msra.mxu0 %v569
        %598 = vmatprep.subr.bf16.mxu0 0
        %599 = vmatpush1.bf16.xpose.msra.mxu0 %v568
        %600 = vmatprep.subr.bf16.mxu0 0
        %601 = vmatpush2.bf16.xpose.msra.mxu0 0
        %602 = vmatprep.subr.bf16.mxu0 0
        %603 = vmatpush2.bf16.xpose.msra.mxu0 0
        %604 = vmatprep.subr.bf16.mxu0 0
        %605 = vmatpush2.bf16.xpose.msra.mxu0 0
        %606 = vmatprep.subr.bf16.mxu0 0
        %607 = vmatpush2.bf16.xpose.msra.mxu0 0
        %608 = vmatprep.subr.bf16.mxu0 0
        %609 = vmatpush2.bf16.xpose.msra.mxu0 0
        %610 = vmatprep.subr.bf16.mxu0 0
        %611 = vmatpush2.bf16.xpose.msra.mxu0 0
        %612 = vmatprep.subr.bf16.mxu0 0
        %613 = vmatpush2.bf16.xpose.msra.mxu0 0
        %614 = vmatprep.subr.bf16.mxu0 0
        %615 = vmatpush2.bf16.xpose.msra.mxu0 0
        %616 = vmatprep.mubr.bf16.mxu0 0
        %617 = vmatmul.mubr.bf16.gmra.mxu0 %v520
        %v618 = vpop.f32.mrf.mxu0
        %v619 = vadd.f32 0.0, %v618
        %v620 = vpop.f32.mrf.mxu0
        %v621 = vpop.f32.mrf.mxu0
        %v622 = vadd.f32 0.0, %v621
        %v623 = vpop.f32.mrf.mxu0
        %624 = vmatprep.mubr.bf16.mxu0 0
        %625 = vmatmul.mubr.bf16.gmra.mxu0 %v521
        %v626 = vpop.f32.mrf.mxu0
        %v627 = vadd.f32 0.0, %v626
        %v628 = vpop.f32.mrf.mxu0
        %v629 = vpop.f32.mrf.mxu0
        %v630 = vadd.f32 0.0, %v629
        %v631 = vpop.f32.mrf.mxu0
        %632 = vmatprep.mubr.bf16.mxu0 0
        %633 = vmatmul.mubr.bf16.gmra.mxu0 %v522
        %v634 = vpop.f32.mrf.mxu0
        %v635 = vadd.f32 0.0, %v634
        %v636 = vpop.f32.mrf.mxu0
        %v637 = vpop.f32.mrf.mxu0
        %v638 = vadd.f32 0.0, %v637
        %v639 = vpop.f32.mrf.mxu0
        %640 = vmatprep.mubr.bf16.mxu0 0
        %641 = vmatmul.mubr.bf16.gmra.mxu0 %v523
        %v642 = vpop.f32.mrf.mxu0
        %v643 = vadd.f32 0.0, %v642
        %v644 = vpop.f32.mrf.mxu0
        %v645 = vpop.f32.mrf.mxu0
        %v646 = vadd.f32 0.0, %v645
        %v647 = vpop.f32.mrf.mxu0
        %648 = vmatprep.mubr.bf16.mxu0 0
        %649 = vmatmul.mubr.bf16.gmra.mxu0 %v524
        %v650 = vpop.f32.mrf.mxu0
        %v651 = vadd.f32 0.0, %v650
        %v652 = vpop.f32.mrf.mxu0
        %v653 = vpop.f32.mrf.mxu0
        %v654 = vadd.f32 0.0, %v653
        %v655 = vpop.f32.mrf.mxu0
        %656 = vmatprep.mubr.bf16.mxu0 0
        %657 = vmatmul.mubr.bf16.gmra.mxu0 %v525
        %v658 = vpop.f32.mrf.mxu0
        %v659 = vadd.f32 0.0, %v658
        %v660 = vpop.f32.mrf.mxu0
        %v661 = vpop.f32.mrf.mxu0
        %v662 = vadd.f32 0.0, %v661
        %v663 = vpop.f32.mrf.mxu0
        %664 = vmatprep.mubr.bf16.mxu0 0
        %665 = vmatmul.mubr.bf16.gmra.mxu0 %v526
        %v666 = vpop.f32.mrf.mxu0
        %v667 = vadd.f32 0.0, %v666
        %v668 = vpop.f32.mrf.mxu0
        %v669 = vpop.f32.mrf.mxu0
        %v670 = vadd.f32 0.0, %v669
        %v671 = vpop.f32.mrf.mxu0
        %672 = vmatprep.mubr.bf16.mxu0 0
        %673 = vmatmul.mubr.bf16.gmra.mxu0 %v527
        %v674 = vpop.f32.mrf.mxu0
        %v675 = vadd.f32 0.0, %v674
        %v676 = vpop.f32.mrf.mxu0
        %v677 = vpop.f32.mrf.mxu0
        %v678 = vadd.f32 0.0, %v677
        %v679 = vpop.f32.mrf.mxu0
        %680 = vdwg.mxu0
        %s681 = smul.u32 %s24, 128
        %s682 = smul.u32 %s25, 128
        %s683 = sadd.s32 %s681, 128
        %p684 = scmp.lt.s32.totalorder %s682, %s683
        %s685 = sadd.s32 %s682, 128
        %p686 = scmp.lt.s32.totalorder %s681, %s685
        %p687 = pnand %p684, %p686
        %p688 = pneg %p687
        // Predicated region
        $region45: #{tpu_custom_call.1} parent=39 // pred_check
          _
        $region46: #{tpu_custom_call.1} parent=39 // pred_check_branch
          %690 = sbr.rel (%p687) target = $region48
        $region47: #{tpu_custom_call.1} parent=39 // pred_region
          %v691 = vlaneseq
          %v692 = vshrl.u32 %v691, 7
          %v693 = vadd.s32 %v692, 8
          %v694 = vadd.s32 %v692, 16
          %v695 = vadd.s32 %v692, 24
          %v696 = vadd.s32 %v692, 32
          %v697 = vadd.s32 %v692, 40
          %v698 = vadd.s32 %v692, 48
          %v699 = vadd.s32 %v692, 56
          %v700 = vadd.s32 %v692, 64
          %v701 = vadd.s32 %v692, 72
          %v702 = vadd.s32 %v692, 80
          %v703 = vadd.s32 %v692, 88
          %v704 = vadd.s32 %v692, 96
          %v705 = vadd.s32 %v692, 104
          %v706 = vadd.s32 %v692, 112
          %v707 = vadd.s32 %v692, 120
          %s708 = ssub.s32 %s681, %s682
          %v709 = vstv %s708
          %v710 = vadd.s32 %v692, %v709
          %v711 = vadd.s32 %v693, %v709
          %v712 = vadd.s32 %v694, %v709
          %v713 = vadd.s32 %v695, %v709
          %v714 = vadd.s32 %v696, %v709
          %v715 = vadd.s32 %v697, %v709
          %v716 = vadd.s32 %v698, %v709
          %v717 = vadd.s32 %v699, %v709
          %v718 = vadd.s32 %v700, %v709
          %v719 = vadd.s32 %v701, %v709
          %v720 = vadd.s32 %v702, %v709
          %v721 = vadd.s32 %v703, %v709
          %v722 = vadd.s32 %v704, %v709
          %v723 = vadd.s32 %v705, %v709
          %v724 = vadd.s32 %v706, %v709
          %v725 = vadd.s32 %v707, %v709
          %v726 = vlaneseq
          %v727 = vand.u32 %v726, 127
          %vm728 = vcmp.ne.s32.totalorder %v710, %v727
          %vm729 = vcmp.ne.s32.totalorder %v711, %v727
          %vm730 = vcmp.ne.s32.totalorder %v712, %v727
          %vm731 = vcmp.ne.s32.totalorder %v713, %v727
          %vm732 = vcmp.ne.s32.totalorder %v714, %v727
          %vm733 = vcmp.ne.s32.totalorder %v715, %v727
          %vm734 = vcmp.ne.s32.totalorder %v716, %v727
          %vm735 = vcmp.ne.s32.totalorder %v717, %v727
          %vm736 = vcmp.ne.s32.totalorder %v718, %v727
          %vm737 = vcmp.ne.s32.totalorder %v719, %v727
          %vm738 = vcmp.ne.s32.totalorder %v720, %v727
          %vm739 = vcmp.ne.s32.totalorder %v721, %v727
          %vm740 = vcmp.ne.s32.totalorder %v722, %v727
          %vm741 = vcmp.ne.s32.totalorder %v723, %v727
          %vm742 = vcmp.ne.s32.totalorder %v724, %v727
          %vm743 = vcmp.ne.s32.totalorder %v725, %v727
          %v744 = vsel %vm728, %v619, -inf
          %v745 = vsel %vm729, %v622, -inf
          %v746 = vsel %vm730, %v627, -inf
          %v747 = vsel %vm731, %v630, -inf
          %v748 = vsel %vm732, %v635, -inf
          %v749 = vsel %vm733, %v638, -inf
          %v750 = vsel %vm734, %v643, -inf
          %v751 = vsel %vm735, %v646, -inf
          %v752 = vsel %vm736, %v651, -inf
          %v753 = vsel %vm737, %v654, -inf
          %v754 = vsel %vm738, %v659, -inf
          %v755 = vsel %vm739, %v662, -inf
          %v756 = vsel %vm740, %v667, -inf
          %v757 = vsel %vm741, %v670, -inf
          %v758 = vsel %vm742, %v675, -inf
          %v759 = vsel %vm743, %v678, -inf
          %760 = vmax.xlane.f32.xlu0 %v744
          %v761 = vpop.xlane.xlu0 %760
          %762 = vmax.xlane.f32.xlu0 %v745
          %v763 = vpop.xlane.xlu0 %762
          %764 = vmax.xlane.f32.xlu0 %v746
          %v765 = vpop.xlane.xlu0 %764
          %766 = vmax.xlane.f32.xlu0 %v747
          %v767 = vpop.xlane.xlu0 %766
          %768 = vmax.xlane.f32.xlu0 %v748
          %v769 = vpop.xlane.xlu0 %768
          %770 = vmax.xlane.f32.xlu0 %v749
          %v771 = vpop.xlane.xlu0 %770
          %772 = vmax.xlane.f32.xlu0 %v750
          %v773 = vpop.xlane.xlu0 %772
          %774 = vmax.xlane.f32.xlu0 %v751
          %v775 = vpop.xlane.xlu0 %774
          %776 = vmax.xlane.f32.xlu0 %v752
          %v777 = vpop.xlane.xlu0 %776
          %778 = vmax.xlane.f32.xlu0 %v753
          %v779 = vpop.xlane.xlu0 %778
          %780 = vmax.xlane.f32.xlu0 %v754
          %v781 = vpop.xlane.xlu0 %780
          %782 = vmax.xlane.f32.xlu0 %v755
          %v783 = vpop.xlane.xlu0 %782
          %784 = vmax.xlane.f32.xlu0 %v756
          %v785 = vpop.xlane.xlu0 %784
          %786 = vmax.xlane.f32.xlu0 %v757
          %v787 = vpop.xlane.xlu0 %786
          %788 = vmax.xlane.f32.xlu0 %v758
          %v789 = vpop.xlane.xlu0 %788
          %790 = vmax.xlane.f32.xlu0 %v759
          %v791 = vpop.xlane.xlu0 %790
          %v792 = vld [vmem:[#allocation3] sm:$0xff]
          %v793 = vld [vmem:[#allocation3 + $0x8] sm:$0xff]
          %v794 = vld [vmem:[#allocation3 + $0x10] sm:$0xff]
          %v795 = vld [vmem:[#allocation3 + $0x18] sm:$0xff]
          %v796 = vld [vmem:[#allocation3 + $0x20] sm:$0xff]
          %v797 = vld [vmem:[#allocation3 + $0x28] sm:$0xff]
          %v798 = vld [vmem:[#allocation3 + $0x30] sm:$0xff]
          %v799 = vld [vmem:[#allocation3 + $0x38] sm:$0xff]
          %v800 = vld [vmem:[#allocation3 + $0x40] sm:$0xff]
          %v801 = vld [vmem:[#allocation3 + $0x48] sm:$0xff]
          %v802 = vld [vmem:[#allocation3 + $0x50] sm:$0xff]
          %v803 = vld [vmem:[#allocation3 + $0x58] sm:$0xff]
          %v804 = vld [vmem:[#allocation3 + $0x60] sm:$0xff]
          %v805 = vld [vmem:[#allocation3 + $0x68] sm:$0xff]
          %v806 = vld [vmem:[#allocation3 + $0x70] sm:$0xff]
          %v807 = vld [vmem:[#allocation3 + $0x78] sm:$0xff]
          %v808 = vmax.f32 %v792, %v761
          %v809 = vmax.f32 %v793, %v763
          %v810 = vmax.f32 %v794, %v765
          %v811 = vmax.f32 %v795, %v767
          %v812 = vmax.f32 %v796, %v769
          %v813 = vmax.f32 %v797, %v771
          %v814 = vmax.f32 %v798, %v773
          %v815 = vmax.f32 %v799, %v775
          %v816 = vmax.f32 %v800, %v777
          %v817 = vmax.f32 %v801, %v779
          %v818 = vmax.f32 %v802, %v781
          %v819 = vmax.f32 %v803, %v783
          %v820 = vmax.f32 %v804, %v785
          %v821 = vmax.f32 %v805, %v787
          %v822 = vmax.f32 %v806, %v789
          %v823 = vmax.f32 %v807, %v791
          %v824 = vld [vmem:[#allocation4] sm:$0xff]
          %v825 = vld [vmem:[#allocation4 + $0x8] sm:$0xff]
          %v826 = vld [vmem:[#allocation4 + $0x10] sm:$0xff]
          %v827 = vld [vmem:[#allocation4 + $0x18] sm:$0xff]
          %v828 = vld [vmem:[#allocation4 + $0x20] sm:$0xff]
          %v829 = vld [vmem:[#allocation4 + $0x28] sm:$0xff]
          %v830 = vld [vmem:[#allocation4 + $0x30] sm:$0xff]
          %v831 = vld [vmem:[#allocation4 + $0x38] sm:$0xff]
          %v832 = vld [vmem:[#allocation4 + $0x40] sm:$0xff]
          %v833 = vld [vmem:[#allocation4 + $0x48] sm:$0xff]
          %v834 = vld [vmem:[#allocation4 + $0x50] sm:$0xff]
          %v835 = vld [vmem:[#allocation4 + $0x58] sm:$0xff]
          %v836 = vld [vmem:[#allocation4 + $0x60] sm:$0xff]
          %v837 = vld [vmem:[#allocation4 + $0x68] sm:$0xff]
          %v838 = vld [vmem:[#allocation4 + $0x70] sm:$0xff]
          %v839 = vld [vmem:[#allocation4 + $0x78] sm:$0xff]
          %v840 = vsub.f32 %v792, %v808
          %v841 = vsub.f32 %v793, %v809
          %v842 = vsub.f32 %v794, %v810
          %v843 = vsub.f32 %v795, %v811
          %v844 = vsub.f32 %v796, %v812
          %v845 = vsub.f32 %v797, %v813
          %v846 = vsub.f32 %v798, %v814
          %v847 = vsub.f32 %v799, %v815
          %v848 = vsub.f32 %v800, %v816
          %v849 = vsub.f32 %v801, %v817
          %v850 = vsub.f32 %v802, %v818
          %v851 = vsub.f32 %v803, %v819
          %v852 = vsub.f32 %v804, %v820
          %v853 = vsub.f32 %v805, %v821
          %v854 = vsub.f32 %v806, %v822
          %v855 = vsub.f32 %v807, %v823
          %v856 = vmul.f32 %v840, 1.442695
          %v857 = vpow.pop %v856
          %v858 = vmul.f32 %v841, 1.442695
          %v859 = vpow.pop %v858
          %v860 = vmul.f32 %v842, 1.442695
          %v861 = vpow.pop %v860
          %v862 = vmul.f32 %v843, 1.442695
          %v863 = vpow.pop %v862
          %v864 = vmul.f32 %v844, 1.442695
          %v865 = vpow.pop %v864
          %v866 = vmul.f32 %v845, 1.442695
          %v867 = vpow.pop %v866
          %v868 = vmul.f32 %v846, 1.442695
          %v869 = vpow.pop %v868
          %v870 = vmul.f32 %v847, 1.442695
          %v871 = vpow.pop %v870
          %v872 = vmul.f32 %v848, 1.442695
          %v873 = vpow.pop %v872
          %v874 = vmul.f32 %v849, 1.442695
          %v875 = vpow.pop %v874
          %v876 = vmul.f32 %v850, 1.442695
          %v877 = vpow.pop %v876
          %v878 = vmul.f32 %v851, 1.442695
          %v879 = vpow.pop %v878
          %v880 = vmul.f32 %v852, 1.442695
          %v881 = vpow.pop %v880
          %v882 = vmul.f32 %v853, 1.442695
          %v883 = vpow.pop %v882
          %v884 = vmul.f32 %v854, 1.442695
          %v885 = vpow.pop %v884
          %v886 = vmul.f32 %v855, 1.442695
          %v887 = vpow.pop %v886
          %v888 = vmul.f32 %v824, %v857
          %v889 = vmul.f32 %v825, %v859
          %v890 = vmul.f32 %v826, %v861
          %v891 = vmul.f32 %v827, %v863
          %v892 = vmul.f32 %v828, %v865
          %v893 = vmul.f32 %v829, %v867
          %v894 = vmul.f32 %v830, %v869
          %v895 = vmul.f32 %v831, %v871
          %v896 = vmul.f32 %v832, %v873
          %v897 = vmul.f32 %v833, %v875
          %v898 = vmul.f32 %v834, %v877
          %v899 = vmul.f32 %v835, %v879
          %v900 = vmul.f32 %v836, %v881
          %v901 = vmul.f32 %v837, %v883
          %v902 = vmul.f32 %v838, %v885
          %v903 = vmul.f32 %v839, %v887
          %905 = vset.pattern.permute.xlu0 0
          %906 = vperm.xlu0 %905, %v808
          %v907 = vpop.permute.xlu0 %906
          %910 = vset.pattern.permute.xlu0 0
          %911 = vperm.xlu0 %910, %v809
          %v912 = vpop.permute.xlu0 %911
          %915 = vset.pattern.permute.xlu0 0
          %916 = vperm.xlu0 %915, %v810
          %v917 = vpop.permute.xlu0 %916
          %920 = vset.pattern.permute.xlu0 0
          %921 = vperm.xlu0 %920, %v811
          %v922 = vpop.permute.xlu0 %921
          %925 = vset.pattern.permute.xlu0 0
          %926 = vperm.xlu0 %925, %v812
          %v927 = vpop.permute.xlu0 %926
          %930 = vset.pattern.permute.xlu0 0
          %931 = vperm.xlu0 %930, %v813
          %v932 = vpop.permute.xlu0 %931
          %935 = vset.pattern.permute.xlu0 0
          %936 = vperm.xlu0 %935, %v814
          %v937 = vpop.permute.xlu0 %936
          %940 = vset.pattern.permute.xlu0 0
          %941 = vperm.xlu0 %940, %v815
          %v942 = vpop.permute.xlu0 %941
          %945 = vset.pattern.permute.xlu0 0
          %946 = vperm.xlu0 %945, %v816
          %v947 = vpop.permute.xlu0 %946
          %950 = vset.pattern.permute.xlu0 0
          %951 = vperm.xlu0 %950, %v817
          %v952 = vpop.permute.xlu0 %951
          %955 = vset.pattern.permute.xlu0 0
          %956 = vperm.xlu0 %955, %v818
          %v957 = vpop.permute.xlu0 %956
          %960 = vset.pattern.permute.xlu0 0
          %961 = vperm.xlu0 %960, %v819
          %v962 = vpop.permute.xlu0 %961
          %965 = vset.pattern.permute.xlu0 0
          %966 = vperm.xlu0 %965, %v820
          %v967 = vpop.permute.xlu0 %966
          %970 = vset.pattern.permute.xlu0 0
          %971 = vperm.xlu0 %970, %v821
          %v972 = vpop.permute.xlu0 %971
          %975 = vset.pattern.permute.xlu0 0
          %976 = vperm.xlu0 %975, %v822
          %v977 = vpop.permute.xlu0 %976
          %980 = vset.pattern.permute.xlu0 0
          %981 = vperm.xlu0 %980, %v823
          %v982 = vpop.permute.xlu0 %981
          %v984 = vsub.f32 %v744, %v907
          %v985 = vsub.f32 %v745, %v912
          %v986 = vsub.f32 %v746, %v917
          %v987 = vsub.f32 %v747, %v922
          %v988 = vsub.f32 %v748, %v927
          %v989 = vsub.f32 %v749, %v932
          %v990 = vsub.f32 %v750, %v937
          %v991 = vsub.f32 %v751, %v942
          %v992 = vsub.f32 %v752, %v947
          %v993 = vsub.f32 %v753, %v952
          %v994 = vsub.f32 %v754, %v957
          %v995 = vsub.f32 %v755, %v962
          %v996 = vsub.f32 %v756, %v967
          %v997 = vsub.f32 %v757, %v972
          %v998 = vsub.f32 %v758, %v977
          %v999 = vsub.f32 %v759, %v982
          %v1000 = vmul.f32 %v984, 1.442695
          %v1001 = vpow.pop %v1000
          %v1002 = vmul.f32 %v985, 1.442695
          %v1003 = vpow.pop %v1002
          %v1004 = vmul.f32 %v986, 1.442695
          %v1005 = vpow.pop %v1004
          %v1006 = vmul.f32 %v987, 1.442695
          %v1007 = vpow.pop %v1006
          %v1008 = vmul.f32 %v988, 1.442695
          %v1009 = vpow.pop %v1008
          %v1010 = vmul.f32 %v989, 1.442695
          %v1011 = vpow.pop %v1010
          %v1012 = vmul.f32 %v990, 1.442695
          %v1013 = vpow.pop %v1012
          %v1014 = vmul.f32 %v991, 1.442695
          %v1015 = vpow.pop %v1014
          %v1016 = vmul.f32 %v992, 1.442695
          %v1017 = vpow.pop %v1016
          %v1018 = vmul.f32 %v993, 1.442695
          %v1019 = vpow.pop %v1018
          %v1020 = vmul.f32 %v994, 1.442695
          %v1021 = vpow.pop %v1020
          %v1022 = vmul.f32 %v995, 1.442695
          %v1023 = vpow.pop %v1022
          %v1024 = vmul.f32 %v996, 1.442695
          %v1025 = vpow.pop %v1024
          %v1026 = vmul.f32 %v997, 1.442695
          %v1027 = vpow.pop %v1026
          %v1028 = vmul.f32 %v998, 1.442695
          %v1029 = vpow.pop %v1028
          %v1030 = vmul.f32 %v999, 1.442695
          %v1031 = vpow.pop %v1030
          %1032 = vadd.xlane.f32.xlu0 %v1001
          %v1033 = vpop.xlane.xlu0 %1032
          %1034 = vadd.xlane.f32.xlu0 %v1003
          %v1035 = vpop.xlane.xlu0 %1034
          %1036 = vadd.xlane.f32.xlu0 %v1005
          %v1037 = vpop.xlane.xlu0 %1036
          %1038 = vadd.xlane.f32.xlu0 %v1007
          %v1039 = vpop.xlane.xlu0 %1038
          %1040 = vadd.xlane.f32.xlu0 %v1009
          %v1041 = vpop.xlane.xlu0 %1040
          %1042 = vadd.xlane.f32.xlu0 %v1011
          %v1043 = vpop.xlane.xlu0 %1042
          %1044 = vadd.xlane.f32.xlu0 %v1013
          %v1045 = vpop.xlane.xlu0 %1044
          %1046 = vadd.xlane.f32.xlu0 %v1015
          %v1047 = vpop.xlane.xlu0 %1046
          %1048 = vadd.xlane.f32.xlu0 %v1017
          %v1049 = vpop.xlane.xlu0 %1048
          %1050 = vadd.xlane.f32.xlu0 %v1019
          %v1051 = vpop.xlane.xlu0 %1050
          %1052 = vadd.xlane.f32.xlu0 %v1021
          %v1053 = vpop.xlane.xlu0 %1052
          %1054 = vadd.xlane.f32.xlu0 %v1023
          %v1055 = vpop.xlane.xlu0 %1054
          %1056 = vadd.xlane.f32.xlu0 %v1025
          %v1057 = vpop.xlane.xlu0 %1056
          %1058 = vadd.xlane.f32.xlu0 %v1027
          %v1059 = vpop.xlane.xlu0 %1058
          %1060 = vadd.xlane.f32.xlu0 %v1029
          %v1061 = vpop.xlane.xlu0 %1060
          %1062 = vadd.xlane.f32.xlu0 %v1031
          %v1063 = vpop.xlane.xlu0 %1062
          %v1064 = vadd.f32 %v888, %v1033
          %v1065 = vadd.f32 %v889, %v1035
          %v1066 = vadd.f32 %v890, %v1037
          %v1067 = vadd.f32 %v891, %v1039
          %v1068 = vadd.f32 %v892, %v1041
          %v1069 = vadd.f32 %v893, %v1043
          %v1070 = vadd.f32 %v894, %v1045
          %v1071 = vadd.f32 %v895, %v1047
          %v1072 = vadd.f32 %v896, %v1049
          %v1073 = vadd.f32 %v897, %v1051
          %v1074 = vadd.f32 %v898, %v1053
          %v1075 = vadd.f32 %v899, %v1055
          %v1076 = vadd.f32 %v900, %v1057
          %v1077 = vadd.f32 %v901, %v1059
          %v1078 = vadd.f32 %v902, %v1061
          %v1079 = vadd.f32 %v903, %v1063
          %vm1080 = vcmask 7168
          %1081 = vst.msk [vmem:[#allocation4] sm:$0xff] %vm1080, %v1064
          %1082 = vst.msk [vmem:[#allocation4 + $0x8] sm:$0xff] %vm1080, %v1065
          %1083 = vst.msk [vmem:[#allocation4 + $0x10] sm:$0xff] %vm1080, %v1066
          %1084 = vst.msk [vmem:[#allocation4 + $0x18] sm:$0xff] %vm1080, %v1067
          %1085 = vst.msk [vmem:[#allocation4 + $0x20] sm:$0xff] %vm1080, %v1068
          %1086 = vst.msk [vmem:[#allocation4 + $0x28] sm:$0xff] %vm1080, %v1069
          %1087 = vst.msk [vmem:[#allocation4 + $0x30] sm:$0xff] %vm1080, %v1070
          %1088 = vst.msk [vmem:[#allocation4 + $0x38] sm:$0xff] %vm1080, %v1071
          %1089 = vst.msk [vmem:[#allocation4 + $0x40] sm:$0xff] %vm1080, %v1072
          %1090 = vst.msk [vmem:[#allocation4 + $0x48] sm:$0xff] %vm1080, %v1073
          %1091 = vst.msk [vmem:[#allocation4 + $0x50] sm:$0xff] %vm1080, %v1074
          %1092 = vst.msk [vmem:[#allocation4 + $0x58] sm:$0xff] %vm1080, %v1075
          %1093 = vst.msk [vmem:[#allocation4 + $0x60] sm:$0xff] %vm1080, %v1076
          %1094 = vst.msk [vmem:[#allocation4 + $0x68] sm:$0xff] %vm1080, %v1077
          %1095 = vst.msk [vmem:[#allocation4 + $0x70] sm:$0xff] %vm1080, %v1078
          %1096 = vst.msk [vmem:[#allocation4 + $0x78] sm:$0xff] %vm1080, %v1079
          %1097 = vst.msk [vmem:[#allocation3] sm:$0xff] %vm1080, %v808
          %1098 = vst.msk [vmem:[#allocation3 + $0x8] sm:$0xff] %vm1080, %v809
          %1099 = vst.msk [vmem:[#allocation3 + $0x10] sm:$0xff] %vm1080, %v810
          %1100 = vst.msk [vmem:[#allocation3 + $0x18] sm:$0xff] %vm1080, %v811
          %1101 = vst.msk [vmem:[#allocation3 + $0x20] sm:$0xff] %vm1080, %v812
          %1102 = vst.msk [vmem:[#allocation3 + $0x28] sm:$0xff] %vm1080, %v813
          %1103 = vst.msk [vmem:[#allocation3 + $0x30] sm:$0xff] %vm1080, %v814
          %1104 = vst.msk [vmem:[#allocation3 + $0x38] sm:$0xff] %vm1080, %v815
          %1105 = vst.msk [vmem:[#allocation3 + $0x40] sm:$0xff] %vm1080, %v816
          %1106 = vst.msk [vmem:[#allocation3 + $0x48] sm:$0xff] %vm1080, %v817
          %1107 = vst.msk [vmem:[#allocation3 + $0x50] sm:$0xff] %vm1080, %v818
          %1108 = vst.msk [vmem:[#allocation3 + $0x58] sm:$0xff] %vm1080, %v819
          %1109 = vst.msk [vmem:[#allocation3 + $0x60] sm:$0xff] %vm1080, %v820
          %1110 = vst.msk [vmem:[#allocation3 + $0x68] sm:$0xff] %vm1080, %v821
          %1111 = vst.msk [vmem:[#allocation3 + $0x70] sm:$0xff] %vm1080, %v822
          %1112 = vst.msk [vmem:[#allocation3 + $0x78] sm:$0xff] %vm1080, %v823
        $region48: #{tpu_custom_call.1} parent=39 // pred_fallthru
          _
        %p1113 = pneg %p688
        // Predicated region
        $region49: #{tpu_custom_call.1} parent=39 // pred_check
          _
        $region50: #{tpu_custom_call.1} parent=39 // pred_check_branch
          %1115 = sbr.rel (%p688) target = $region52
        $region51: #{tpu_custom_call.1} parent=39 // pred_region
          %1116 = vmax.xlane.f32.xlu0 %v619
          %v1117 = vpop.xlane.xlu0 %1116
          %1118 = vmax.xlane.f32.xlu0 %v622
          %v1119 = vpop.xlane.xlu0 %1118
          %1120 = vmax.xlane.f32.xlu0 %v627
          %v1121 = vpop.xlane.xlu0 %1120
          %1122 = vmax.xlane.f32.xlu0 %v630
          %v1123 = vpop.xlane.xlu0 %1122
          %1124 = vmax.xlane.f32.xlu0 %v635
          %v1125 = vpop.xlane.xlu0 %1124
          %1126 = vmax.xlane.f32.xlu0 %v638
          %v1127 = vpop.xlane.xlu0 %1126
          %1128 = vmax.xlane.f32.xlu0 %v643
          %v1129 = vpop.xlane.xlu0 %1128
          %1130 = vmax.xlane.f32.xlu0 %v646
          %v1131 = vpop.xlane.xlu0 %1130
          %1132 = vmax.xlane.f32.xlu0 %v651
          %v1133 = vpop.xlane.xlu0 %1132
          %1134 = vmax.xlane.f32.xlu0 %v654
          %v1135 = vpop.xlane.xlu0 %1134
          %1136 = vmax.xlane.f32.xlu0 %v659
          %v1137 = vpop.xlane.xlu0 %1136
          %1138 = vmax.xlane.f32.xlu0 %v662
          %v1139 = vpop.xlane.xlu0 %1138
          %1140 = vmax.xlane.f32.xlu0 %v667
          %v1141 = vpop.xlane.xlu0 %1140
          %1142 = vmax.xlane.f32.xlu0 %v670
          %v1143 = vpop.xlane.xlu0 %1142
          %1144 = vmax.xlane.f32.xlu0 %v675
          %v1145 = vpop.xlane.xlu0 %1144
          %1146 = vmax.xlane.f32.xlu0 %v678
          %v1147 = vpop.xlane.xlu0 %1146
          %v1148 = vld [vmem:[#allocation3] sm:$0xff]
          %v1149 = vld [vmem:[#allocation3 + $0x8] sm:$0xff]
          %v1150 = vld [vmem:[#allocation3 + $0x10] sm:$0xff]
          %v1151 = vld [vmem:[#allocation3 + $0x18] sm:$0xff]
          %v1152 = vld [vmem:[#allocation3 + $0x20] sm:$0xff]
          %v1153 = vld [vmem:[#allocation3 + $0x28] sm:$0xff]
          %v1154 = vld [vmem:[#allocation3 + $0x30] sm:$0xff]
          %v1155 = vld [vmem:[#allocation3 + $0x38] sm:$0xff]
          %v1156 = vld [vmem:[#allocation3 + $0x40] sm:$0xff]
          %v1157 = vld [vmem:[#allocation3 + $0x48] sm:$0xff]
          %v1158 = vld [vmem:[#allocation3 + $0x50] sm:$0xff]
          %v1159 = vld [vmem:[#allocation3 + $0x58] sm:$0xff]
          %v1160 = vld [vmem:[#allocation3 + $0x60] sm:$0xff]
          %v1161 = vld [vmem:[#allocation3 + $0x68] sm:$0xff]
          %v1162 = vld [vmem:[#allocation3 + $0x70] sm:$0xff]
          %v1163 = vld [vmem:[#allocation3 + $0x78] sm:$0xff]
          %v1164 = vmax.f32 %v1148, %v1117
          %v1165 = vmax.f32 %v1149, %v1119
          %v1166 = vmax.f32 %v1150, %v1121
          %v1167 = vmax.f32 %v1151, %v1123
          %v1168 = vmax.f32 %v1152, %v1125
          %v1169 = vmax.f32 %v1153, %v1127
          %v1170 = vmax.f32 %v1154, %v1129
          %v1171 = vmax.f32 %v1155, %v1131
          %v1172 = vmax.f32 %v1156, %v1133
          %v1173 = vmax.f32 %v1157, %v1135
          %v1174 = vmax.f32 %v1158, %v1137
          %v1175 = vmax.f32 %v1159, %v1139
          %v1176 = vmax.f32 %v1160, %v1141
          %v1177 = vmax.f32 %v1161, %v1143
          %v1178 = vmax.f32 %v1162, %v1145
          %v1179 = vmax.f32 %v1163, %v1147
          %v1180 = vld [vmem:[#allocation4] sm:$0xff]
          %v1181 = vld [vmem:[#allocation4 + $0x8] sm:$0xff]
          %v1182 = vld [vmem:[#allocation4 + $0x10] sm:$0xff]
          %v1183 = vld [vmem:[#allocation4 + $0x18] sm:$0xff]
          %v1184 = vld [vmem:[#allocation4 + $0x20] sm:$0xff]
          %v1185 = vld [vmem:[#allocation4 + $0x28] sm:$0xff]
          %v1186 = vld [vmem:[#allocation4 + $0x30] sm:$0xff]
          %v1187 = vld [vmem:[#allocation4 + $0x38] sm:$0xff]
          %v1188 = vld [vmem:[#allocation4 + $0x40] sm:$0xff]
          %v1189 = vld [vmem:[#allocation4 + $0x48] sm:$0xff]
          %v1190 = vld [vmem:[#allocation4 + $0x50] sm:$0xff]
          %v1191 = vld [vmem:[#allocation4 + $0x58] sm:$0xff]
          %v1192 = vld [vmem:[#allocation4 + $0x60] sm:$0xff]
          %v1193 = vld [vmem:[#allocation4 + $0x68] sm:$0xff]
          %v1194 = vld [vmem:[#allocation4 + $0x70] sm:$0xff]
          %v1195 = vld [vmem:[#allocation4 + $0x78] sm:$0xff]
          %v1196 = vsub.f32 %v1148, %v1164
          %v1197 = vsub.f32 %v1149, %v1165
          %v1198 = vsub.f32 %v1150, %v1166
          %v1199 = vsub.f32 %v1151, %v1167
          %v1200 = vsub.f32 %v1152, %v1168
          %v1201 = vsub.f32 %v1153, %v1169
          %v1202 = vsub.f32 %v1154, %v1170
          %v1203 = vsub.f32 %v1155, %v1171
          %v1204 = vsub.f32 %v1156, %v1172
          %v1205 = vsub.f32 %v1157, %v1173
          %v1206 = vsub.f32 %v1158, %v1174
          %v1207 = vsub.f32 %v1159, %v1175
          %v1208 = vsub.f32 %v1160, %v1176
          %v1209 = vsub.f32 %v1161, %v1177
          %v1210 = vsub.f32 %v1162, %v1178
          %v1211 = vsub.f32 %v1163, %v1179
          %v1212 = vmul.f32 %v1196, 1.442695
          %v1213 = vpow.pop %v1212
          %v1214 = vmul.f32 %v1197, 1.442695
          %v1215 = vpow.pop %v1214
          %v1216 = vmul.f32 %v1198, 1.442695
          %v1217 = vpow.pop %v1216
          %v1218 = vmul.f32 %v1199, 1.442695
          %v1219 = vpow.pop %v1218
          %v1220 = vmul.f32 %v1200, 1.442695
          %v1221 = vpow.pop %v1220
          %v1222 = vmul.f32 %v1201, 1.442695
          %v1223 = vpow.pop %v1222
          %v1224 = vmul.f32 %v1202, 1.442695
          %v1225 = vpow.pop %v1224
          %v1226 = vmul.f32 %v1203, 1.442695
          %v1227 = vpow.pop %v1226
          %v1228 = vmul.f32 %v1204, 1.442695
          %v1229 = vpow.pop %v1228
          %v1230 = vmul.f32 %v1205, 1.442695
          %v1231 = vpow.pop %v1230
          %v1232 = vmul.f32 %v1206, 1.442695
          %v1233 = vpow.pop %v1232
          %v1234 = vmul.f32 %v1207, 1.442695
          %v1235 = vpow.pop %v1234
          %v1236 = vmul.f32 %v1208, 1.442695
          %v1237 = vpow.pop %v1236
          %v1238 = vmul.f32 %v1209, 1.442695
          %v1239 = vpow.pop %v1238
          %v1240 = vmul.f32 %v1210, 1.442695
          %v1241 = vpow.pop %v1240
          %v1242 = vmul.f32 %v1211, 1.442695
          %v1243 = vpow.pop %v1242
          %v1244 = vmul.f32 %v1180, %v1213
          %v1245 = vmul.f32 %v1181, %v1215
          %v1246 = vmul.f32 %v1182, %v1217
          %v1247 = vmul.f32 %v1183, %v1219
          %v1248 = vmul.f32 %v1184, %v1221
          %v1249 = vmul.f32 %v1185, %v1223
          %v1250 = vmul.f32 %v1186, %v1225
          %v1251 = vmul.f32 %v1187, %v1227
          %v1252 = vmul.f32 %v1188, %v1229
          %v1253 = vmul.f32 %v1189, %v1231
          %v1254 = vmul.f32 %v1190, %v1233
          %v1255 = vmul.f32 %v1191, %v1235
          %v1256 = vmul.f32 %v1192, %v1237
          %v1257 = vmul.f32 %v1193, %v1239
          %v1258 = vmul.f32 %v1194, %v1241
          %v1259 = vmul.f32 %v1195, %v1243
          %1261 = vset.pattern.permute.xlu0 0
          %1262 = vperm.xlu0 %1261, %v1164
          %v1263 = vpop.permute.xlu0 %1262
          %1266 = vset.pattern.permute.xlu0 0
          %1267 = vperm.xlu0 %1266, %v1165
          %v1268 = vpop.permute.xlu0 %1267
          %1271 = vset.pattern.permute.xlu0 0
          %1272 = vperm.xlu0 %1271, %v1166
          %v1273 = vpop.permute.xlu0 %1272
          %1276 = vset.pattern.permute.xlu0 0
          %1277 = vperm.xlu0 %1276, %v1167
          %v1278 = vpop.permute.xlu0 %1277
          %1281 = vset.pattern.permute.xlu0 0
          %1282 = vperm.xlu0 %1281, %v1168
          %v1283 = vpop.permute.xlu0 %1282
          %1286 = vset.pattern.permute.xlu0 0
          %1287 = vperm.xlu0 %1286, %v1169
          %v1288 = vpop.permute.xlu0 %1287
          %1291 = vset.pattern.permute.xlu0 0
          %1292 = vperm.xlu0 %1291, %v1170
          %v1293 = vpop.permute.xlu0 %1292
          %1296 = vset.pattern.permute.xlu0 0
          %1297 = vperm.xlu0 %1296, %v1171
          %v1298 = vpop.permute.xlu0 %1297
          %1301 = vset.pattern.permute.xlu0 0
          %1302 = vperm.xlu0 %1301, %v1172
          %v1303 = vpop.permute.xlu0 %1302
          %1306 = vset.pattern.permute.xlu0 0
          %1307 = vperm.xlu0 %1306, %v1173
          %v1308 = vpop.permute.xlu0 %1307
          %1311 = vset.pattern.permute.xlu0 0
          %1312 = vperm.xlu0 %1311, %v1174
          %v1313 = vpop.permute.xlu0 %1312
          %1316 = vset.pattern.permute.xlu0 0
          %1317 = vperm.xlu0 %1316, %v1175
          %v1318 = vpop.permute.xlu0 %1317
          %1321 = vset.pattern.permute.xlu0 0
          %1322 = vperm.xlu0 %1321, %v1176
          %v1323 = vpop.permute.xlu0 %1322
          %1326 = vset.pattern.permute.xlu0 0
          %1327 = vperm.xlu0 %1326, %v1177
          %v1328 = vpop.permute.xlu0 %1327
          %1331 = vset.pattern.permute.xlu0 0
          %1332 = vperm.xlu0 %1331, %v1178
          %v1333 = vpop.permute.xlu0 %1332
          %1336 = vset.pattern.permute.xlu0 0
          %1337 = vperm.xlu0 %1336, %v1179
          %v1338 = vpop.permute.xlu0 %1337
          %v1340 = vsub.f32 %v619, %v1263
          %v1341 = vsub.f32 %v622, %v1268
          %v1342 = vsub.f32 %v627, %v1273
          %v1343 = vsub.f32 %v630, %v1278
          %v1344 = vsub.f32 %v635, %v1283
          %v1345 = vsub.f32 %v638, %v1288
          %v1346 = vsub.f32 %v643, %v1293
          %v1347 = vsub.f32 %v646, %v1298
          %v1348 = vsub.f32 %v651, %v1303
          %v1349 = vsub.f32 %v654, %v1308
          %v1350 = vsub.f32 %v659, %v1313
          %v1351 = vsub.f32 %v662, %v1318
          %v1352 = vsub.f32 %v667, %v1323
          %v1353 = vsub.f32 %v670, %v1328
          %v1354 = vsub.f32 %v675, %v1333
          %v1355 = vsub.f32 %v678, %v1338
          %v1356 = vmul.f32 %v1340, 1.442695
          %v1357 = vpow.pop %v1356
          %v1358 = vmul.f32 %v1341, 1.442695
          %v1359 = vpow.pop %v1358
          %v1360 = vmul.f32 %v1342, 1.442695
          %v1361 = vpow.pop %v1360
          %v1362 = vmul.f32 %v1343, 1.442695
          %v1363 = vpow.pop %v1362
          %v1364 = vmul.f32 %v1344, 1.442695
          %v1365 = vpow.pop %v1364
          %v1366 = vmul.f32 %v1345, 1.442695
          %v1367 = vpow.pop %v1366
          %v1368 = vmul.f32 %v1346, 1.442695
          %v1369 = vpow.pop %v1368
          %v1370 = vmul.f32 %v1347, 1.442695
          %v1371 = vpow.pop %v1370
          %v1372 = vmul.f32 %v1348, 1.442695
          %v1373 = vpow.pop %v1372
          %v1374 = vmul.f32 %v1349, 1.442695
          %v1375 = vpow.pop %v1374
          %v1376 = vmul.f32 %v1350, 1.442695
          %v1377 = vpow.pop %v1376
          %v1378 = vmul.f32 %v1351, 1.442695
          %v1379 = vpow.pop %v1378
          %v1380 = vmul.f32 %v1352, 1.442695
          %v1381 = vpow.pop %v1380
          %v1382 = vmul.f32 %v1353, 1.442695
          %v1383 = vpow.pop %v1382
          %v1384 = vmul.f32 %v1354, 1.442695
          %v1385 = vpow.pop %v1384
          %v1386 = vmul.f32 %v1355, 1.442695
          %v1387 = vpow.pop %v1386
          %1388 = vadd.xlane.f32.xlu0 %v1357
          %v1389 = vpop.xlane.xlu0 %1388
          %1390 = vadd.xlane.f32.xlu0 %v1359
          %v1391 = vpop.xlane.xlu0 %1390
          %1392 = vadd.xlane.f32.xlu0 %v1361
          %v1393 = vpop.xlane.xlu0 %1392
          %1394 = vadd.xlane.f32.xlu0 %v1363
          %v1395 = vpop.xlane.xlu0 %1394
          %1396 = vadd.xlane.f32.xlu0 %v1365
          %v1397 = vpop.xlane.xlu0 %1396
          %1398 = vadd.xlane.f32.xlu0 %v1367
          %v1399 = vpop.xlane.xlu0 %1398
          %1400 = vadd.xlane.f32.xlu0 %v1369
          %v1401 = vpop.xlane.xlu0 %1400
          %1402 = vadd.xlane.f32.xlu0 %v1371
          %v1403 = vpop.xlane.xlu0 %1402
          %1404 = vadd.xlane.f32.xlu0 %v1373
          %v1405 = vpop.xlane.xlu0 %1404
          %1406 = vadd.xlane.f32.xlu0 %v1375
          %v1407 = vpop.xlane.xlu0 %1406
          %1408 = vadd.xlane.f32.xlu0 %v1377
          %v1409 = vpop.xlane.xlu0 %1408
          %1410 = vadd.xlane.f32.xlu0 %v1379
          %v1411 = vpop.xlane.xlu0 %1410
          %1412 = vadd.xlane.f32.xlu0 %v1381
          %v1413 = vpop.xlane.xlu0 %1412
          %1414 = vadd.xlane.f32.xlu0 %v1383
          %v1415 = vpop.xlane.xlu0 %1414
          %1416 = vadd.xlane.f32.xlu0 %v1385
          %v1417 = vpop.xlane.xlu0 %1416
          %1418 = vadd.xlane.f32.xlu0 %v1387
          %v1419 = vpop.xlane.xlu0 %1418
          %v1420 = vadd.f32 %v1244, %v1389
          %v1421 = vadd.f32 %v1245, %v1391
          %v1422 = vadd.f32 %v1246, %v1393
          %v1423 = vadd.f32 %v1247, %v1395
          %v1424 = vadd.f32 %v1248, %v1397
          %v1425 = vadd.f32 %v1249, %v1399
          %v1426 = vadd.f32 %v1250, %v1401
          %v1427 = vadd.f32 %v1251, %v1403
          %v1428 = vadd.f32 %v1252, %v1405
          %v1429 = vadd.f32 %v1253, %v1407
          %v1430 = vadd.f32 %v1254, %v1409
          %v1431 = vadd.f32 %v1255, %v1411
          %v1432 = vadd.f32 %v1256, %v1413
          %v1433 = vadd.f32 %v1257, %v1415
          %v1434 = vadd.f32 %v1258, %v1417
          %v1435 = vadd.f32 %v1259, %v1419
          %vm1436 = vcmask 7168
          %1437 = vst.msk [vmem:[#allocation4] sm:$0xff] %vm1436, %v1420
          %1438 = vst.msk [vmem:[#allocation4 + $0x8] sm:$0xff] %vm1436, %v1421
          %1439 = vst.msk [vmem:[#allocation4 + $0x10] sm:$0xff] %vm1436, %v1422
          %1440 = vst.msk [vmem:[#allocation4 + $0x18] sm:$0xff] %vm1436, %v1423
          %1441 = vst.msk [vmem:[#allocation4 + $0x20] sm:$0xff] %vm1436, %v1424
          %1442 = vst.msk [vmem:[#allocation4 + $0x28] sm:$0xff] %vm1436, %v1425
          %1443 = vst.msk [vmem:[#allocation4 + $0x30] sm:$0xff] %vm1436, %v1426
          %1444 = vst.msk [vmem:[#allocation4 + $0x38] sm:$0xff] %vm1436, %v1427
          %1445 = vst.msk [vmem:[#allocation4 + $0x40] sm:$0xff] %vm1436, %v1428
          %1446 = vst.msk [vmem:[#allocation4 + $0x48] sm:$0xff] %vm1436, %v1429
          %1447 = vst.msk [vmem:[#allocation4 + $0x50] sm:$0xff] %vm1436, %v1430
          %1448 = vst.msk [vmem:[#allocation4 + $0x58] sm:$0xff] %vm1436, %v1431
          %1449 = vst.msk [vmem:[#allocation4 + $0x60] sm:$0xff] %vm1436, %v1432
          %1450 = vst.msk [vmem:[#allocation4 + $0x68] sm:$0xff] %vm1436, %v1433
          %1451 = vst.msk [vmem:[#allocation4 + $0x70] sm:$0xff] %vm1436, %v1434
          %1452 = vst.msk [vmem:[#allocation4 + $0x78] sm:$0xff] %vm1436, %v1435
          %1453 = vst.msk [vmem:[#allocation3] sm:$0xff] %vm1436, %v1164
          %1454 = vst.msk [vmem:[#allocation3 + $0x8] sm:$0xff] %vm1436, %v1165
          %1455 = vst.msk [vmem:[#allocation3 + $0x10] sm:$0xff] %vm1436, %v1166
          %1456 = vst.msk [vmem:[#allocation3 + $0x18] sm:$0xff] %vm1436, %v1167
          %1457 = vst.msk [vmem:[#allocation3 + $0x20] sm:$0xff] %vm1436, %v1168
          %1458 = vst.msk [vmem:[#allocation3 + $0x28] sm:$0xff] %vm1436, %v1169
          %1459 = vst.msk [vmem:[#allocation3 + $0x30] sm:$0xff] %vm1436, %v1170
          %1460 = vst.msk [vmem:[#allocation3 + $0x38] sm:$0xff] %vm1436, %v1171
          %1461 = vst.msk [vmem:[#allocation3 + $0x40] sm:$0xff] %vm1436, %v1172
          %1462 = vst.msk [vmem:[#allocation3 + $0x48] sm:$0xff] %vm1436, %v1173
          %1463 = vst.msk [vmem:[#allocation3 + $0x50] sm:$0xff] %vm1436, %v1174
          %1464 = vst.msk [vmem:[#allocation3 + $0x58] sm:$0xff] %vm1436, %v1175
          %1465 = vst.msk [vmem:[#allocation3 + $0x60] sm:$0xff] %vm1436, %v1176
          %1466 = vst.msk [vmem:[#allocation3 + $0x68] sm:$0xff] %vm1436, %v1177
          %1467 = vst.msk [vmem:[#allocation3 + $0x70] sm:$0xff] %vm1436, %v1178
          %1468 = vst.msk [vmem:[#allocation3 + $0x78] sm:$0xff] %vm1436, %v1179
        $region52: #{tpu_custom_call.1} parent=39 // pred_fallthru
          _
        %p1469 = scmp.eq.s32.totalorder %s25, 1
        // Predicated region
        $region53: #{tpu_custom_call.1} parent=39 // pred_check
          %p1470 = pneg %p1469
        $region54: #{tpu_custom_call.1} parent=39 // pred_check_branch
          %1472 = sbr.rel (%p1470) target = $region56
        $region55: #{tpu_custom_call.1} parent=39 // pred_region
          %v1473 = vld [vmem:[#allocation3] sm:$0xff]
          %v1474 = vld [vmem:[#allocation3 + $0x8] sm:$0xff]
          %v1475 = vld [vmem:[#allocation3 + $0x10] sm:$0xff]
          %v1476 = vld [vmem:[#allocation3 + $0x18] sm:$0xff]
          %v1477 = vld [vmem:[#allocation3 + $0x20] sm:$0xff]
          %v1478 = vld [vmem:[#allocation3 + $0x28] sm:$0xff]
          %v1479 = vld [vmem:[#allocation3 + $0x30] sm:$0xff]
          %v1480 = vld [vmem:[#allocation3 + $0x38] sm:$0xff]
          %v1481 = vld [vmem:[#allocation3 + $0x40] sm:$0xff]
          %v1482 = vld [vmem:[#allocation3 + $0x48] sm:$0xff]
          %v1483 = vld [vmem:[#allocation3 + $0x50] sm:$0xff]
          %v1484 = vld [vmem:[#allocation3 + $0x58] sm:$0xff]
          %v1485 = vld [vmem:[#allocation3 + $0x60] sm:$0xff]
          %v1486 = vld [vmem:[#allocation3 + $0x68] sm:$0xff]
          %v1487 = vld [vmem:[#allocation3 + $0x70] sm:$0xff]
          %v1488 = vld [vmem:[#allocation3 + $0x78] sm:$0xff]
          %v1489 = vld [vmem:[#allocation4] sm:$0xff]
          %v1490 = vld [vmem:[#allocation4 + $0x8] sm:$0xff]
          %v1491 = vld [vmem:[#allocation4 + $0x10] sm:$0xff]
          %v1492 = vld [vmem:[#allocation4 + $0x18] sm:$0xff]
          %v1493 = vld [vmem:[#allocation4 + $0x20] sm:$0xff]
          %v1494 = vld [vmem:[#allocation4 + $0x28] sm:$0xff]
          %v1495 = vld [vmem:[#allocation4 + $0x30] sm:$0xff]
          %v1496 = vld [vmem:[#allocation4 + $0x38] sm:$0xff]
          %v1497 = vld [vmem:[#allocation4 + $0x40] sm:$0xff]
          %v1498 = vld [vmem:[#allocation4 + $0x48] sm:$0xff]
          %v1499 = vld [vmem:[#allocation4 + $0x50] sm:$0xff]
          %v1500 = vld [vmem:[#allocation4 + $0x58] sm:$0xff]
          %v1501 = vld [vmem:[#allocation4 + $0x60] sm:$0xff]
          %v1502 = vld [vmem:[#allocation4 + $0x68] sm:$0xff]
          %v1503 = vld [vmem:[#allocation4 + $0x70] sm:$0xff]
          %v1504 = vld [vmem:[#allocation4 + $0x78] sm:$0xff]
          %v1505 = vlog2.pop %v1489
          %v1506 = vmul.f32 %v1505, 0.6931472
          %v1507 = vlog2.pop %v1490
          %v1508 = vmul.f32 %v1507, 0.6931472
          %v1509 = vlog2.pop %v1491
          %v1510 = vmul.f32 %v1509, 0.6931472
          %v1511 = vlog2.pop %v1492
          %v1512 = vmul.f32 %v1511, 0.6931472
          %v1513 = vlog2.pop %v1493
          %v1514 = vmul.f32 %v1513, 0.6931472
          %v1515 = vlog2.pop %v1494
          %v1516 = vmul.f32 %v1515, 0.6931472
          %v1517 = vlog2.pop %v1495
          %v1518 = vmul.f32 %v1517, 0.6931472
          %v1519 = vlog2.pop %v1496
          %v1520 = vmul.f32 %v1519, 0.6931472
          %v1521 = vlog2.pop %v1497
          %v1522 = vmul.f32 %v1521, 0.6931472
          %v1523 = vlog2.pop %v1498
          %v1524 = vmul.f32 %v1523, 0.6931472
          %v1525 = vlog2.pop %v1499
          %v1526 = vmul.f32 %v1525, 0.6931472
          %v1527 = vlog2.pop %v1500
          %v1528 = vmul.f32 %v1527, 0.6931472
          %v1529 = vlog2.pop %v1501
          %v1530 = vmul.f32 %v1529, 0.6931472
          %v1531 = vlog2.pop %v1502
          %v1532 = vmul.f32 %v1531, 0.6931472
          %v1533 = vlog2.pop %v1503
          %v1534 = vmul.f32 %v1533, 0.6931472
          %v1535 = vlog2.pop %v1504
          %v1536 = vmul.f32 %v1535, 0.6931472
          %v1537 = vadd.f32 %v1473, %v1506
          %v1538 = vadd.f32 %v1474, %v1508
          %v1539 = vadd.f32 %v1475, %v1510
          %v1540 = vadd.f32 %v1476, %v1512
          %v1541 = vadd.f32 %v1477, %v1514
          %v1542 = vadd.f32 %v1478, %v1516
          %v1543 = vadd.f32 %v1479, %v1518
          %v1544 = vadd.f32 %v1480, %v1520
          %v1545 = vadd.f32 %v1481, %v1522
          %v1546 = vadd.f32 %v1482, %v1524
          %v1547 = vadd.f32 %v1483, %v1526
          %v1548 = vadd.f32 %v1484, %v1528
          %v1549 = vadd.f32 %v1485, %v1530
          %v1550 = vadd.f32 %v1486, %v1532
          %v1551 = vadd.f32 %v1487, %v1534
          %v1552 = vadd.f32 %v1488, %v1536
          %v1553 = vld [vmem:[%s296] sm:$0xff]
          %v1554 = vld [vmem:[%s296 + $0x8] sm:$0xff]
          %v1555 = vld [vmem:[%s296 + $0x10] sm:$0xff]
          %v1556 = vld [vmem:[%s296 + $0x18] sm:$0xff]
          %v1557 = vld [vmem:[%s296 + $0x20] sm:$0xff]
          %v1558 = vld [vmem:[%s296 + $0x28] sm:$0xff]
          %v1559 = vld [vmem:[%s296 + $0x30] sm:$0xff]
          %v1560 = vld [vmem:[%s296 + $0x38] sm:$0xff]
          %v1561 = vld [vmem:[%s296 + $0x40] sm:$0xff]
          %v1562 = vld [vmem:[%s296 + $0x48] sm:$0xff]
          %v1563 = vld [vmem:[%s296 + $0x50] sm:$0xff]
          %v1564 = vld [vmem:[%s296 + $0x58] sm:$0xff]
          %v1565 = vld [vmem:[%s296 + $0x60] sm:$0xff]
          %v1566 = vld [vmem:[%s296 + $0x68] sm:$0xff]
          %v1567 = vld [vmem:[%s296 + $0x70] sm:$0xff]
          %v1568 = vld [vmem:[%s296 + $0x78] sm:$0xff]
          %v1569 = vsub.f32 %v1537, %v1553
          %v1570 = vsub.f32 %v1538, %v1554
          %v1571 = vsub.f32 %v1539, %v1555
          %v1572 = vsub.f32 %v1540, %v1556
          %v1573 = vsub.f32 %v1541, %v1557
          %v1574 = vsub.f32 %v1542, %v1558
          %v1575 = vsub.f32 %v1543, %v1559
          %v1576 = vsub.f32 %v1544, %v1560
          %v1577 = vsub.f32 %v1545, %v1561
          %v1578 = vsub.f32 %v1546, %v1562
          %v1579 = vsub.f32 %v1547, %v1563
          %v1580 = vsub.f32 %v1548, %v1564
          %v1581 = vsub.f32 %v1549, %v1565
          %v1582 = vsub.f32 %v1550, %v1566
          %v1583 = vsub.f32 %v1551, %v1567
          %v1584 = vsub.f32 %v1552, %v1568
          %v1585 = vld [vmem:[%s302] sm:$0xff]
          %v1586 = vld [vmem:[%s302 + $0x8] sm:$0xff]
          %v1587 = vld [vmem:[%s302 + $0x10] sm:$0xff]
          %v1588 = vld [vmem:[%s302 + $0x18] sm:$0xff]
          %v1589 = vld [vmem:[%s302 + $0x20] sm:$0xff]
          %v1590 = vld [vmem:[%s302 + $0x28] sm:$0xff]
          %v1591 = vld [vmem:[%s302 + $0x30] sm:$0xff]
          %v1592 = vld [vmem:[%s302 + $0x38] sm:$0xff]
          %v1593 = vld [vmem:[%s302 + $0x40] sm:$0xff]
          %v1594 = vld [vmem:[%s302 + $0x48] sm:$0xff]
          %v1595 = vld [vmem:[%s302 + $0x50] sm:$0xff]
          %v1596 = vld [vmem:[%s302 + $0x58] sm:$0xff]
          %v1597 = vld [vmem:[%s302 + $0x60] sm:$0xff]
          %v1598 = vld [vmem:[%s302 + $0x68] sm:$0xff]
          %v1599 = vld [vmem:[%s302 + $0x70] sm:$0xff]
          %v1600 = vld [vmem:[%s302 + $0x78] sm:$0xff]
          %v1601 = vmul.f32 %v1569, %v1585
          %v1602 = vmul.f32 %v1570, %v1586
          %v1603 = vmul.f32 %v1571, %v1587
          %v1604 = vmul.f32 %v1572, %v1588
          %v1605 = vmul.f32 %v1573, %v1589
          %v1606 = vmul.f32 %v1574, %v1590
          %v1607 = vmul.f32 %v1575, %v1591
          %v1608 = vmul.f32 %v1576, %v1592
          %v1609 = vmul.f32 %v1577, %v1593
          %v1610 = vmul.f32 %v1578, %v1594
          %v1611 = vmul.f32 %v1579, %v1595
          %v1612 = vmul.f32 %v1580, %v1596
          %v1613 = vmul.f32 %v1581, %v1597
          %v1614 = vmul.f32 %v1582, %v1598
          %v1615 = vmul.f32 %v1583, %v1599
          %v1616 = vmul.f32 %v1584, %v1600
          %vm1617 = vcmask 7168
          %v1618 = vsel %vm1617, %v1601, 0.0
          %v1619 = vsel %vm1617, %v1602, 0.0
          %v1620 = vadd.f32 %v1618, %v1619
          %v1621 = vsel %vm1617, %v1603, 0.0
          %v1622 = vadd.f32 %v1620, %v1621
          %v1623 = vsel %vm1617, %v1604, 0.0
          %v1624 = vadd.f32 %v1622, %v1623
          %v1625 = vsel %vm1617, %v1605, 0.0
          %v1626 = vadd.f32 %v1624, %v1625
          %v1627 = vsel %vm1617, %v1606, 0.0
          %v1628 = vadd.f32 %v1626, %v1627
          %v1629 = vsel %vm1617, %v1607, 0.0
          %v1630 = vadd.f32 %v1628, %v1629
          %v1631 = vsel %vm1617, %v1608, 0.0
          %v1632 = vadd.f32 %v1630, %v1631
          %v1633 = vsel %vm1617, %v1609, 0.0
          %v1634 = vadd.f32 %v1632, %v1633
          %v1635 = vsel %vm1617, %v1610, 0.0
          %v1636 = vadd.f32 %v1634, %v1635
          %v1637 = vsel %vm1617, %v1611, 0.0
          %v1638 = vadd.f32 %v1636, %v1637
          %v1639 = vsel %vm1617, %v1612, 0.0
          %v1640 = vadd.f32 %v1638, %v1639
          %v1641 = vsel %vm1617, %v1613, 0.0
          %v1642 = vadd.f32 %v1640, %v1641
          %v1643 = vsel %vm1617, %v1614, 0.0
          %v1644 = vadd.f32 %v1642, %v1643
          %v1645 = vsel %vm1617, %v1615, 0.0
          %v1646 = vadd.f32 %v1644, %v1645
          %v1647 = vsel %vm1617, %v1616, 0.0
          %v1648 = vadd.f32 %v1646, %v1647
          %v1649 = vrot.slane %v1648, 4
          %v1650 = vadd.f32 %v1648, %v1649
          %v1651 = vrot.slane %v1650, 2
          %v1652 = vadd.f32 %v1650, %v1651
          %v1653 = vrot.slane %v1652, 1
          %v1654 = vadd.f32 %v1652, %v1653
          %1656 = vset.pattern.permute.xlu0 0
          %1657 = vperm.xlu0 %1656, %v1654
          %v1658 = vpop.permute.xlu0 %1657
          %1660 = vst [vmem:[%s279] sm:$0xff] %v1658
        $region56: #{tpu_custom_call.1} parent=39 // pred_fallthru
          _
        %s1661 = sand.u32 %s165, 1
        %s1662 = scalar_lea.sflag [#allocation7], %s1661
        %s1663 = sand.u32 %s165, 1
        %s1664 = smul.addr %s1663, 8
        %s1665 = scalar_lea.vmem [#allocation6], %s1664
        // Predicated region
        $region57: #{tpu_custom_call.1} parent=39 // pred_check
          %p1666 = pneg %p175
        $region58: #{tpu_custom_call.1} parent=39 // pred_check_branch
          %1668 = sbr.rel (%p1666) target = $region60
        $region59: #{tpu_custom_call.1} parent=39 // pred_region
          %s1670 = ssub.s32 128, 128
          %1671 = vsyncadd %s1662, %s1670
          %s1672 = smul.addr %s24, 128
          %s1673 = scalar_lea.hbm %s5, %s1672
          %s1675 = sshll.u32 %s1665, 4
          %s1676 = int_to_ptr.vmem [resolvable:$true] %s1675
          %1678 = dma.vmem_to_hbm [thread:$0]  %s1676, 128, %s1673, %s1662
        $region60: #{tpu_custom_call.1} parent=39 // pred_fallthru
          _
      $region40: #{tpu_custom_call.1} parent=5 // pred_fallthru
        _
      %p1679 = scmp.le.s32.totalorder 2, %s15
      // Predicated region
      $region61: #{tpu_custom_call.1} parent=5 // pred_check
        %p1680 = pneg %p1679
      $region62: #{tpu_custom_call.1} parent=5 // pred_check_branch
        %1682 = sbr.rel (%p1680) target = $region64
      $region63: #{tpu_custom_call.1} parent=5 // pred_region
        %s1683 = ssub.s32 %s15, 2
        // Predicated region
        $region65: #{tpu_custom_call.1} parent=63 // pred_check
          %p1684 = pneg %p181
        $region66: #{tpu_custom_call.1} parent=63 // pred_check_branch
          %1686 = sbr.rel (%p1684) target = $region68
        $region67: #{tpu_custom_call.1} parent=63 // pred_region
          %s1687 = sand.u32 %s166, 1
          %s1688 = scalar_lea.sflag [#allocation7], %s1687
          %s1689 = sand.u32 %s166, 1
          %s1690 = smul.addr %s1689, 8
          %s1691 = scalar_lea.vmem [#allocation6], %s1690
          %1692 = dma.done %s1688, 128
        $region68: #{tpu_custom_call.1} parent=63 // pred_fallthru
          _
      $region64: #{tpu_custom_call.1} parent=5 // pred_fallthru
        _
    $region6: #{tpu_custom_call.1} parent=1 // loop_footer
      %s19 = sadd.s32 1, %s15
    $region7: #{tpu_custom_call.1} parent=1 // loop_footer_branch
      %14 = sbr.rel target = $region3
    $region8: #{tpu_custom_call.1} parent=1 // loop_exit
      _
    %1693 = vsyncpa [#allocation7], 1
    %s1694 = scalar_lea.sflag [#allocation7], 1
    %1695 = vsyncpa %s1694, 1

</llo_original>
